<compile_context>
chip_gen: v5e
topology: v5e:2x2
jax: 0.10.0
libtpu: 0.0.40
codegen_flags: <defaults>
</compile_context>

<pallas_src>
import functools

import jax
import jax.numpy as jnp
from jax.experimental import pallas as pl
from jax.experimental.pallas import tpu as pltpu


def _round_up(v, m):
    return -(-v // m) * m


# ----------------------------------------------------------------------------
# Pallas kernels
# ----------------------------------------------------------------------------
def _conv_relu_pool_kernel(p_ref, w_ref, b_ref, o_ref, *, taps):
    """Fused conv-as-GEMM + bias + ReLU + 2x2 max-pool, taps lane-concatenated.

    p_ref: (1, K, taps*TM) bf16  patch block (the `taps` pool offsets side by side)
    w_ref: (Cout, K)       bf16
    b_ref: (Cout, 1)       f32
    o_ref: (Cout, TM)      pooled, relu'd activations (lane-dense)
    """
    tm = o_ref.shape[-1]
    # One wide MXU push instead of `taps` row-starved mini-matmuls.
    acc = jnp.dot(w_ref[...], p_ref[0], preferred_element_type=jnp.float32)
    r = acc[:, :tm]
    for t in range(1, taps):                       # 128-aligned lane slices
        r = jnp.maximum(r, acc[:, t * tm:(t + 1) * tm])
    o_ref[...] = jnp.maximum(r + b_ref[...], 0.0).astype(o_ref.dtype)


def _fc_head_kernel(x_ref, w1_ref, b1_ref, w3_ref, b3_ref, w2_ref, b2_ref,
                    o_ref):
    """Fused fc1 -> relu -> fc3 -> relu -> fc2; batch on the lane axis."""
    h = jnp.dot(w1_ref[...], x_ref[...],
                preferred_element_type=jnp.float32) + b1_ref[...]
    h = jnp.maximum(h, 0.0)
    h = jnp.dot(w3_ref[...], h,
                preferred_element_type=jnp.float32) + b3_ref[...]
    h = jnp.maximum(h, 0.0)
    o = jnp.dot(w2_ref[...], h,
                preferred_element_type=jnp.float32) + b2_ref[...]
    o_ref[...] = o.astype(o_ref.dtype)


# ----------------------------------------------------------------------------
# Tiling helper
# ----------------------------------------------------------------------------
def _pick_tile(m, max_tile):
    """Lane-tile size: multiple of 128, <= max_tile, preferring >=2 grid steps.

    v7x has 2 TensorCores: a 1-step 'parallel' grid leaves one idle, so for
    small problems we pick ~m/2 (rounded up to 128) instead of one big tile.
    """
    m128 = _round_up(m, 128)
    if m128 <= 128:
        return 128
    half = _round_up(m128 // 2, 128)
    return max(128, min(max_tile, half))


# ----------------------------------------------------------------------------
# Glue: pooled-tap patch extraction (pure data rearrangement, no arithmetic)
# ----------------------------------------------------------------------------
def _pooled_patch_tiles(x_chwb, kh, kw, pool, tm, k_pad):
    """Build lane-concatenated pooled-tap patch tiles.

    x_chwb: (C, H, W, B).  Returns p of shape (n_tiles, k_pad, T*tm) where
    T = pool*pool; within each tile the T taps sit in consecutive 128-aligned
    lane chunks.  Columns are ordered (oh, ow, b); features ordered (c, ky, kx)
    to match torch's weight.view(O, C*kh*kw).  Built in x_chwb's dtype (bf16).
    """
    C, H, W, B = x_chwb.shape
    ch, cw = H - kh + 1, W - kw + 1
    assert ch % pool == 0 and cw % pool == 0, (ch, cw, pool)
    oh, ow = ch // pool, cw // pool
    K = C * kh * kw
    M = oh * ow * B
    m_pad = _round_up(M, tm)
    n_tiles = m_pad // tm

    taps = []
    for di in range(pool):
        for dj in range(pool):
            feats = []
            for ky in range(kh):
                for kx in range(kw):
                    y0, x0 = di + ky, dj + kx
                    sl = x_chwb[:, y0:y0 + pool * (oh - 1) + 1:pool,
                                x0:x0 + pool * (ow - 1) + 1:pool, :]
                    feats.append(sl)                         # (C, oh, ow, B)
            f = jnp.stack(feats, axis=1).reshape(K, M)       # (K, M)
            f = jnp.pad(f, ((0, k_pad - K), (0, m_pad - M)))
            taps.append(f.reshape(k_pad, n_tiles, tm))
    p = jnp.stack(taps, axis=2)                              # (k_pad, nt, T, tm)
    # Pure data movement (fused by XLA with the pad/stack); removed entirely
    # once the on-chip im2col (TODO above) lands.
    p = p.transpose(1, 0, 2, 3).reshape(n_tiles, k_pad, len(taps) * tm)
    return p, oh, ow, M


# ----------------------------------------------------------------------------
# Pallas wrappers
# ----------------------------------------------------------------------------
def conv_relu_pool(x_chwb, w, b, *, kh=5, kw=5, pool=2, max_tile=1024,
                   out_dtype=jnp.float32):
    """x: (Cin, H, W, B) -> (Cout, oh, ow, B) = maxpool2x2(relu(conv_valid(x)))."""
    C, H, W, B = x_chwb.shape
    O = w.shape[0]
    K = C * kh * kw
    k_pad = _round_up(K, 128)                 # 75->128 (conv1), 150->256 (conv2)
    T = pool * pool
    oh, ow = (H - kh + 1) // pool, (W - kw + 1) // pool
    M = oh * ow * B
    tm = _pick_tile(M, max_tile)

    # Patches built directly in bf16 -> half the im2col HBM traffic.
    p, oh, ow, M = _pooled_patch_tiles(
        x_chwb.astype(jnp.bfloat16), kh, kw, pool, tm, k_pad)
    n_tiles = p.shape[0]
    m_pad = n_tiles * tm

    w2d = jnp.pad(w.reshape(O, K).astype(jnp.float32),
                  ((0, 0), (0, k_pad - K))).astype(jnp.bfloat16)
    b2d = b.reshape(O, 1).astype(jnp.float32)

    out = pl.pallas_call(
        functools.partial(_conv_relu_pool_kernel, taps=T),
        out_shape=jax.ShapeDtypeStruct((O, m_pad), out_dtype),
        grid=(n_tiles,),
        in_specs=[
            pl.BlockSpec((1, k_pad, T * tm), lambda m: (m, 0, 0)),
            pl.BlockSpec((O, k_pad), lambda m: (0, 0)),
            pl.BlockSpec((O, 1), lambda m: (0, 0)),
        ],
        out_specs=pl.BlockSpec((O, tm), lambda m: (0, m)),
        compiler_params=pltpu.CompilerParams(
            dimension_semantics=("parallel",),
            vmem_limit_bytes=32 * 1024 * 1024),
    )(p, w2d, b2d)
    return out[:, :M].reshape(O, oh, ow, B)     # drop lane padding


def fc_head(x_fb, w1, b1, w3, b3, w2, b2, *, max_tile=512):
    """Fused fc1+relu -> fc3+relu -> fc2 with batch on the lane axis.

    x_fb: (400, B) -> logits (B, 10) f32."""
    feat, B = x_fb.shape
    d1, d3, d_out = w1.shape[0], w3.shape[0], w2.shape[0]
    d1p, d3p = _round_up(d1, 128), _round_up(d3, 128)     # 120->128, 84->128

    bt = _pick_tile(B, max_tile)
    b_pad = _round_up(B, bt)
    n_tiles = b_pad // bt

    x_p = jnp.pad(x_fb.astype(jnp.float32), ((0, 0), (0, b_pad - B)))
    w1p = jnp.pad(w1.astype(jnp.float32), ((0, d1p - d1), (0, 0)))
    b1p = jnp.pad(b1.astype(jnp.float32), (0, d1p - d1)).reshape(d1p, 1)
    w3p = jnp.pad(w3.astype(jnp.float32), ((0, d3p - d3), (0, d1p - d1)))
    b3p = jnp.pad(b3.astype(jnp.float32), (0, d3p - d3)).reshape(d3p, 1)
    w2p = jnp.pad(w2.astype(jnp.float32), ((0, 0), (0, d3p - d3)))
    b2p = b2.astype(jnp.float32).reshape(d_out, 1)

    out = pl.pallas_call(
        _fc_head_kernel,
        out_shape=jax.ShapeDtypeStruct((d_out, b_pad), jnp.float32),
        grid=(n_tiles,),
        in_specs=[
            pl.BlockSpec((feat, bt), lambda i: (0, i)),       # activations: tiled
            pl.BlockSpec(w1p.shape, lambda i: (0, 0)),        # weights: VMEM-resident
            pl.BlockSpec(b1p.shape, lambda i: (0, 0)),
            pl.BlockSpec(w3p.shape, lambda i: (0, 0)),
            pl.BlockSpec(b3p.shape, lambda i: (0, 0)),
            pl.BlockSpec(w2p.shape, lambda i: (0, 0)),
            pl.BlockSpec(b2p.shape, lambda i: (0, 0)),
        ],
        out_specs=pl.BlockSpec((d_out, bt), lambda i: (0, i)),
        compiler_params=pltpu.CompilerParams(
            dimension_semantics=("parallel",),
            vmem_limit_bytes=32 * 1024 * 1024),
    )(x_p, w1p, b1p, w3p, b3p, w2p, b2p)
    return out[:, :B].T                                       # tiny (10,B)->(B,10)


# ----------------------------------------------------------------------------
# Net_cifar10 forward
# ----------------------------------------------------------------------------
def net_cifar10_forward(x, params):
    """x: (B, 3, 32, 32) float32 -> logits (B, 10) float32."""
    B = x.shape[0]
    # (C, H, W, B): batch on the lane axis end-to-end.
    xc = jnp.transpose(x, (1, 2, 3, 0)).astype(jnp.bfloat16)          # (3,32,32,B)
    h1 = conv_relu_pool(xc, params["conv1_w"], params["conv1_b"],
                        max_tile=1024, out_dtype=jnp.bfloat16)        # (6,14,14,B)
    h2 = conv_relu_pool(h1, params["conv2_w"], params["conv2_b"],
                        max_tile=512, out_dtype=jnp.float32)          # (16,5,5,B)
    # torch's x.view(-1, 16*5*5) flattens (C,H,W); with B last this is a reshape.
    flat = h2.reshape(16 * 5 * 5, B)                                   # (400, B)
    return fc_head(flat,
                   params["fc1_w"], params["fc1_b"],
                   params["fc3_w"], params["fc3_b"],
                   params["fc2_w"], params["fc2_b"])                   # (B, 10)


# ----------------------------------------------------------------------------
# Deterministic parameter init (PyTorch default: U(-1/sqrt(fan_in), 1/sqrt(fan_in)))
# ----------------------------------------------------------------------------
def init_params(key):
    def uinit(k, shape, fan_in):
        bound = 1.0 / float(fan_in) ** 0.5
        return jax.random.uniform(k, shape, jnp.float32, -bound, bound)

    ks = jax.random.split(key, 10)
    return {
        "conv1_w": uinit(ks[0], (6, 3, 5, 5), 3 * 25),
        "conv1_b": uinit(ks[1], (6,), 3 * 25),
        "conv2_w": uinit(ks[2], (16, 6, 5, 5), 6 * 25),
        "conv2_b": uinit(ks[3], (16,), 6 * 25),
        "fc1_w": uinit(ks[4], (120, 400), 400),
        "fc1_b": uinit(ks[5], (120,), 400),
        "fc3_w": uinit(ks[6], (84, 120), 120),
        "fc3_b": uinit(ks[7], (84,), 120),
        "fc2_w": uinit(ks[8], (10, 84), 84),
        "fc2_b": uinit(ks[9], (10,), 84),
    }


# Pure-JAX f32 reference for a correctness sanity check of the Pallas path.
def reference_forward(x, params):
    def conv(x, w, b):
        y = jax.lax.conv_general_dilated(
            x, w, (1, 1), "VALID", dimension_numbers=("NCHW", "OIHW", "NCHW"))
        return y + b[None, :, None, None]

    def pool(x):
        return jax.lax.reduce_window(
            x, -jnp.inf, jax.lax.max, (1, 1, 2, 2), (1, 1, 2, 2), "VALID")

    h = pool(jax.nn.relu(conv(x, params["conv1_w"], params["conv1_b"])))
    h = pool(jax.nn.relu(conv(h, params["conv2_w"], params["conv2_b"])))
    h = h.reshape(x.shape[0], -1)
    h = jax.nn.relu(h @ params["fc1_w"].T + params["fc1_b"])
    h = jax.nn.relu(h @ params["fc3_w"].T + params["fc3_b"])
    return h @ params["fc2_w"].T + params["fc2_b"]


if __name__ == "__main__":
    key = jax.random.PRNGKey(0)
    pkey, xkey = jax.random.split(key)
    params = init_params(pkey)
    # CIFAR-10 geometry (32x32) is required by fc1's 16*5*5 input; small batch.
    x = jax.random.normal(xkey, (2, 3, 32, 32), jnp.float32)

    out = jax.jit(net_cifar10_forward)(x, params)
    out = jax.block_until_ready(out)
    assert out.shape == (2, 10), out.shape

    ref = reference_forward(x, params)
    # bf16 conv operands + bf16 conv1->conv2 intermediate, f32 accumulation.
    assert jnp.allclose(out, ref, rtol=2.5e-2, atol=2.5e-2), (out, ref)

    print("KERNEL_OK")
</pallas_src>

<mosaic_0001>
module attributes {stable_mosaic.version = 11 : i64} {
  func.func @_conv_relu_pool_kernel(%arg0: i32, %arg1: memref<1x128x1024xbf16, #tpu.memory_space<vmem>>, %arg2: memref<6x128xbf16, #tpu.memory_space<vmem>>, %arg3: memref<6x1xf32, #tpu.memory_space<vmem>>, %arg4: memref<6x256xbf16, #tpu.memory_space<vmem>>) attributes {dimension_semantics = [#tpu.dimension_semantics<parallel>], iteration_bounds = array<i64: 2>, scalar_prefetch = 0 : i64, scratch_operands = 0 : i64, tpu.core_type = #tpu.core_type<tc>, window_params = [{transform_indices = @transform_0, window_bounds = array<i64: 1, 128, 1024>}, {pipeline_mode = #tpu.pipeline_mode<synchronous>, transform_indices = @transform_1, window_bounds = array<i64: 6, 128>}, {pipeline_mode = #tpu.pipeline_mode<synchronous>, transform_indices = @transform_2, window_bounds = array<i64: 6, 1>}, {transform_indices = @transform_3, window_bounds = array<i64: 6, 256>}]} {
    %c0 = arith.constant 0 : index
    %c0_0 = arith.constant 0 : index
    %0 = vector.load %arg2[%c0, %c0_0] : memref<6x128xbf16, #tpu.memory_space<vmem>>, vector<6x128xbf16>
    %c0_1 = arith.constant 0 : index
    %c0_2 = arith.constant 0 : index
    %c0_3 = arith.constant 0 : index
    %1 = vector.load %arg1[%c0_1, %c0_2, %c0_3] : memref<1x128x1024xbf16, #tpu.memory_space<vmem>>, vector<1x128x1024xbf16>
    %2 = vector.shape_cast %1 : vector<1x128x1024xbf16> to vector<128x1024xbf16>
    %cst = arith.constant dense<0.000000e+00> : vector<6x1024xf32>
    %3 = tpu.matmul %0, %2, %cst {dimension_numbers = #tpu.dot_dimension_numbers<[1], [0], [0], [1], [0, 0, 1, 1], [], []>} : vector<6x128xbf16>, vector<128x1024xbf16>, vector<6x1024xf32> -> vector<6x1024xf32>
    %4 = vector.extract_strided_slice %3 {offsets = [0, 0], sizes = [6, 256], strides = [1, 1]} : vector<6x1024xf32> to vector<6x256xf32>
    %5 = vector.extract_strided_slice %3 {offsets = [0, 256], sizes = [6, 256], strides = [1, 1]} : vector<6x1024xf32> to vector<6x256xf32>
    %6 = arith.maximumf %4, %5 : vector<6x256xf32>
    %7 = vector.extract_strided_slice %3 {offsets = [0, 512], sizes = [6, 256], strides = [1, 1]} : vector<6x1024xf32> to vector<6x256xf32>
    %8 = arith.maximumf %6, %7 : vector<6x256xf32>
    %9 = vector.extract_strided_slice %3 {offsets = [0, 768], sizes = [6, 256], strides = [1, 1]} : vector<6x1024xf32> to vector<6x256xf32>
    %10 = arith.maximumf %8, %9 : vector<6x256xf32>
    %c0_4 = arith.constant 0 : index
    %c0_5 = arith.constant 0 : index
    %11 = vector.load %arg3[%c0_4, %c0_5] : memref<6x1xf32, #tpu.memory_space<vmem>>, vector<6x1xf32>
    %12 = vector.broadcast %11 : vector<6x1xf32> to vector<6x256xf32>
    %13 = arith.addf %10, %12 : vector<6x256xf32>
    %cst_6 = arith.constant 0.000000e+00 : f32
    %14 = vector.broadcast %cst_6 : f32 to vector<6x256xf32>
    %15 = arith.maximumf %13, %14 : vector<6x256xf32>
    %16 = arith.truncf %15 : vector<6x256xf32> to vector<6x256xbf16>
    %c0_7 = arith.constant 0 : index
    %c0_8 = arith.constant 0 : index
    %17 = vector.load %arg4[%c0_7, %c0_8] : memref<6x256xbf16, #tpu.memory_space<vmem>>, vector<6x256xbf16>
    tpu.vector_store %arg4[%c0_7, %c0_8], %16 {strides = array<i32>} : memref<6x256xbf16, #tpu.memory_space<vmem>>, vector<6x256xbf16>,
    return
  }
  func.func @transform_0(%arg0: i32) -> (i32, i32, i32) {
    %c0_i32 = arith.constant 0 : i32
    %c0_i32_0 = arith.constant 0 : i32
    %c0_i32_1 = arith.constant 0 : i32
    return %arg0, %c0_i32, %c0_i32_0 : i32, i32, i32
  }
  func.func @transform_1(%arg0: i32) -> (i32, i32) {
    %c0_i32 = arith.constant 0 : i32
    %c0_i32_0 = arith.constant 0 : i32
    %c0_i32_1 = arith.constant 0 : i32
    return %c0_i32, %c0_i32_0 : i32, i32
  }
  func.func @transform_2(%arg0: i32) -> (i32, i32) {
    %c0_i32 = arith.constant 0 : i32
    %c0_i32_0 = arith.constant 0 : i32
    %c0_i32_1 = arith.constant 0 : i32
    return %c0_i32, %c0_i32_0 : i32, i32
  }
  func.func @transform_3(%arg0: i32) -> (i32, i32) {
    %c0_i32 = arith.constant 0 : i32
    %c0_i32_0 = arith.constant 0 : i32
    return %c0_i32, %arg0 : i32, i32
  }
}

module attributes {stable_mosaic.version = 11 : i64} {
  func.func @_conv_relu_pool_kernel(%arg0: i32, %arg1: memref<1x256x512xbf16, #tpu.memory_space<vmem>>, %arg2: memref<16x256xbf16, #tpu.memory_space<vmem>>, %arg3: memref<16x1xf32, #tpu.memory_space<vmem>>, %arg4: memref<16x128xf32, #tpu.memory_space<vmem>>) attributes {dimension_semantics = [#tpu.dimension_semantics<parallel>], iteration_bounds = array<i64: 1>, scalar_prefetch = 0 : i64, scratch_operands = 0 : i64, tpu.core_type = #tpu.core_type<tc>, window_params = [{transform_indices = @transform_0, window_bounds = array<i64: 1, 256, 512>}, {pipeline_mode = #tpu.pipeline_mode<synchronous>, transform_indices = @transform_1, window_bounds = array<i64: 16, 256>}, {pipeline_mode = #tpu.pipeline_mode<synchronous>, transform_indices = @transform_2, window_bounds = array<i64: 16, 1>}, {transform_indices = @transform_3, window_bounds = array<i64: 16, 128>}]} {
    %c0 = arith.constant 0 : index
    %c0_0 = arith.constant 0 : index
    %0 = vector.load %arg2[%c0, %c0_0] : memref<16x256xbf16, #tpu.memory_space<vmem>>, vector<16x256xbf16>
    %c0_1 = arith.constant 0 : index
    %c0_2 = arith.constant 0 : index
    %c0_3 = arith.constant 0 : index
    %1 = vector.load %arg1[%c0_1, %c0_2, %c0_3] : memref<1x256x512xbf16, #tpu.memory_space<vmem>>, vector<1x256x512xbf16>
    %2 = vector.shape_cast %1 : vector<1x256x512xbf16> to vector<256x512xbf16>
    %cst = arith.constant dense<0.000000e+00> : vector<16x512xf32>
    %3 = tpu.matmul %0, %2, %cst {dimension_numbers = #tpu.dot_dimension_numbers<[1], [0], [0], [1], [0, 0, 1, 1], [], []>} : vector<16x256xbf16>, vector<256x512xbf16>, vector<16x512xf32> -> vector<16x512xf32>
    %4 = vector.extract_strided_slice %3 {offsets = [0, 0], sizes = [16, 128], strides = [1, 1]} : vector<16x512xf32> to vector<16x128xf32>
    %5 = vector.extract_strided_slice %3 {offsets = [0, 128], sizes = [16, 128], strides = [1, 1]} : vector<16x512xf32> to vector<16x128xf32>
    %6 = arith.maximumf %4, %5 : vector<16x128xf32>
    %7 = vector.extract_strided_slice %3 {offsets = [0, 256], sizes = [16, 128], strides = [1, 1]} : vector<16x512xf32> to vector<16x128xf32>
    %8 = arith.maximumf %6, %7 : vector<16x128xf32>
    %9 = vector.extract_strided_slice %3 {offsets = [0, 384], sizes = [16, 128], strides = [1, 1]} : vector<16x512xf32> to vector<16x128xf32>
    %10 = arith.maximumf %8, %9 : vector<16x128xf32>
    %c0_4 = arith.constant 0 : index
    %c0_5 = arith.constant 0 : index
    %11 = vector.load %arg3[%c0_4, %c0_5] : memref<16x1xf32, #tpu.memory_space<vmem>>, vector<16x1xf32>
    %12 = vector.broadcast %11 : vector<16x1xf32> to vector<16x128xf32>
    %13 = arith.addf %10, %12 : vector<16x128xf32>
    %cst_6 = arith.constant 0.000000e+00 : f32
    %14 = vector.broadcast %cst_6 : f32 to vector<16x128xf32>
    %15 = arith.maximumf %13, %14 : vector<16x128xf32>
    %c0_7 = arith.constant 0 : index
    %c0_8 = arith.constant 0 : index
    %16 = vector.load %arg4[%c0_7, %c0_8] : memref<16x128xf32, #tpu.memory_space<vmem>>, vector<16x128xf32>
    tpu.vector_store %arg4[%c0_7, %c0_8], %15 {strides = array<i32>} : memref<16x128xf32, #tpu.memory_space<vmem>>, vector<16x128xf32>,
    return
  }
  func.func @transform_0(%arg0: i32) -> (i32, i32, i32) {
    %c0_i32 = arith.constant 0 : i32
    %c0_i32_0 = arith.constant 0 : i32
    %c0_i32_1 = arith.constant 0 : i32
    return %arg0, %c0_i32, %c0_i32_0 : i32, i32, i32
  }
  func.func @transform_1(%arg0: i32) -> (i32, i32) {
    %c0_i32 = arith.constant 0 : i32
    %c0_i32_0 = arith.constant 0 : i32
    %c0_i32_1 = arith.constant 0 : i32
    return %c0_i32, %c0_i32_0 : i32, i32
  }
  func.func @transform_2(%arg0: i32) -> (i32, i32) {
    %c0_i32 = arith.constant 0 : i32
    %c0_i32_0 = arith.constant 0 : i32
    %c0_i32_1 = arith.constant 0 : i32
    return %c0_i32, %c0_i32_0 : i32, i32
  }
  func.func @transform_3(%arg0: i32) -> (i32, i32) {
    %c0_i32 = arith.constant 0 : i32
    %c0_i32_0 = arith.constant 0 : i32
    return %c0_i32, %arg0 : i32, i32
  }
}

module attributes {stable_mosaic.version = 11 : i64} {
  func.func @_fc_head_kernel(%arg0: i32, %arg1: memref<400x128xf32, #tpu.memory_space<vmem>>, %arg2: memref<128x400xf32, #tpu.memory_space<vmem>>, %arg3: memref<128x1xf32, #tpu.memory_space<vmem>>, %arg4: memref<128x128xf32, #tpu.memory_space<vmem>>, %arg5: memref<128x1xf32, #tpu.memory_space<vmem>>, %arg6: memref<10x128xf32, #tpu.memory_space<vmem>>, %arg7: memref<10x1xf32, #tpu.memory_space<vmem>>, %arg8: memref<10x128xf32, #tpu.memory_space<vmem>>) attributes {dimension_semantics = [#tpu.dimension_semantics<parallel>], iteration_bounds = array<i64: 1>, scalar_prefetch = 0 : i64, scratch_operands = 0 : i64, tpu.core_type = #tpu.core_type<tc>, window_params = [{transform_indices = @transform_0, window_bounds = array<i64: 400, 128>}, {pipeline_mode = #tpu.pipeline_mode<synchronous>, transform_indices = @transform_1, window_bounds = array<i64: 128, 400>}, {pipeline_mode = #tpu.pipeline_mode<synchronous>, transform_indices = @transform_2, window_bounds = array<i64: 128, 1>}, {pipeline_mode = #tpu.pipeline_mode<synchronous>, transform_indices = @transform_3, window_bounds = array<i64: 128, 128>}, {pipeline_mode = #tpu.pipeline_mode<synchronous>, transform_indices = @transform_4, window_bounds = array<i64: 128, 1>}, {pipeline_mode = #tpu.pipeline_mode<synchronous>, transform_indices = @transform_5, window_bounds = array<i64: 10, 128>}, {pipeline_mode = #tpu.pipeline_mode<synchronous>, transform_indices = @transform_6, window_bounds = array<i64: 10, 1>}, {transform_indices = @transform_7, window_bounds = array<i64: 10, 128>}]} {
    %c0 = arith.constant 0 : index
    %c0_0 = arith.constant 0 : index
    %0 = vector.load %arg2[%c0, %c0_0] : memref<128x400xf32, #tpu.memory_space<vmem>>, vector<128x400xf32>
    %c0_1 = arith.constant 0 : index
    %c0_2 = arith.constant 0 : index
    %1 = vector.load %arg1[%c0_1, %c0_2] : memref<400x128xf32, #tpu.memory_space<vmem>>, vector<400x128xf32>
    %cst = arith.constant dense<0.000000e+00> : vector<128x128xf32>
    %2 = tpu.matmul %0, %1, %cst {dimension_numbers = #tpu.dot_dimension_numbers<[1], [0], [0], [1], [0, 0, 1, 1], [], []>} : vector<128x400xf32>, vector<400x128xf32>, vector<128x128xf32> -> vector<128x128xf32>
    %c0_3 = arith.constant 0 : index
    %c0_4 = arith.constant 0 : index
    %3 = vector.load %arg3[%c0_3, %c0_4] : memref<128x1xf32, #tpu.memory_space<vmem>>, vector<128x1xf32>
    %4 = vector.broadcast %3 : vector<128x1xf32> to vector<128x128xf32>
    %5 = arith.addf %2, %4 : vector<128x128xf32>
    %cst_5 = arith.constant 0.000000e+00 : f32
    %6 = vector.broadcast %cst_5 : f32 to vector<128x128xf32>
    %7 = arith.maximumf %5, %6 : vector<128x128xf32>
    %c0_6 = arith.constant 0 : index
    %c0_7 = arith.constant 0 : index
    %8 = vector.load %arg4[%c0_6, %c0_7] : memref<128x128xf32, #tpu.memory_space<vmem>>, vector<128x128xf32>
    %cst_8 = arith.constant dense<0.000000e+00> : vector<128x128xf32>
    %9 = tpu.matmul %8, %7, %cst_8 {dimension_numbers = #tpu.dot_dimension_numbers<[1], [0], [0], [1], [0, 0, 1, 1], [], []>} : vector<128x128xf32>, vector<128x128xf32>, vector<128x128xf32> -> vector<128x128xf32>
    %c0_9 = arith.constant 0 : index
    %c0_10 = arith.constant 0 : index
    %10 = vector.load %arg5[%c0_9, %c0_10] : memref<128x1xf32, #tpu.memory_space<vmem>>, vector<128x1xf32>
    %11 = vector.broadcast %10 : vector<128x1xf32> to vector<128x128xf32>
    %12 = arith.addf %9, %11 : vector<128x128xf32>
    %cst_11 = arith.constant 0.000000e+00 : f32
    %13 = vector.broadcast %cst_11 : f32 to vector<128x128xf32>
    %14 = arith.maximumf %12, %13 : vector<128x128xf32>
    %c0_12 = arith.constant 0 : index
    %c0_13 = arith.constant 0 : index
    %15 = vector.load %arg6[%c0_12, %c0_13] : memref<10x128xf32, #tpu.memory_space<vmem>>, vector<10x128xf32>
    %cst_14 = arith.constant dense<0.000000e+00> : vector<10x128xf32>
    %16 = tpu.matmul %15, %14, %cst_14 {dimension_numbers = #tpu.dot_dimension_numbers<[1], [0], [0], [1], [0, 0, 1, 1], [], []>} : vector<10x128xf32>, vector<128x128xf32>, vector<10x128xf32> -> vector<10x128xf32>
    %c0_15 = arith.constant 0 : index
    %c0_16 = arith.constant 0 : index
    %17 = vector.load %arg7[%c0_15, %c0_16] : memref<10x1xf32, #tpu.memory_space<vmem>>, vector<10x1xf32>
    %18 = vector.broadcast %17 : vector<10x1xf32> to vector<10x128xf32>
    %19 = arith.addf %16, %18 : vector<10x128xf32>
    %c0_17 = arith.constant 0 : index
    %c0_18 = arith.constant 0 : index
    %20 = vector.load %arg8[%c0_17, %c0_18] : memref<10x128xf32, #tpu.memory_space<vmem>>, vector<10x128xf32>
    tpu.vector_store %arg8[%c0_17, %c0_18], %19 {strides = array<i32>} : memref<10x128xf32, #tpu.memory_space<vmem>>, vector<10x128xf32>,
    return
  }
  func.func @transform_0(%arg0: i32) -> (i32, i32) {
    %c0_i32 = arith.constant 0 : i32
    %c0_i32_0 = arith.constant 0 : i32
    return %c0_i32, %arg0 : i32, i32
  }
  func.func @transform_1(%arg0: i32) -> (i32, i32) {
    %c0_i32 = arith.constant 0 : i32
    %c0_i32_0 = arith.constant 0 : i32
    %c0_i32_1 = arith.constant 0 : i32
    return %c0_i32, %c0_i32_0 : i32, i32
  }
  func.func @transform_2(%arg0: i32) -> (i32, i32) {
    %c0_i32 = arith.constant 0 : i32
    %c0_i32_0 = arith.constant 0 : i32
    %c0_i32_1 = arith.constant 0 : i32
    return %c0_i32, %c0_i32_0 : i32, i32
  }
  func.func @transform_3(%arg0: i32) -> (i32, i32) {
    %c0_i32 = arith.constant 0 : i32
    %c0_i32_0 = arith.constant 0 : i32
    %c0_i32_1 = arith.constant 0 : i32
    return %c0_i32, %c0_i32_0 : i32, i32
  }
  func.func @transform_4(%arg0: i32) -> (i32, i32) {
    %c0_i32 = arith.constant 0 : i32
    %c0_i32_0 = arith.constant 0 : i32
    %c0_i32_1 = arith.constant 0 : i32
    return %c0_i32, %c0_i32_0 : i32, i32
  }
  func.func @transform_5(%arg0: i32) -> (i32, i32) {
    %c0_i32 = arith.constant 0 : i32
    %c0_i32_0 = arith.constant 0 : i32
    %c0_i32_1 = arith.constant 0 : i32
    return %c0_i32, %c0_i32_0 : i32, i32
  }
  func.func @transform_6(%arg0: i32) -> (i32, i32) {
    %c0_i32 = arith.constant 0 : i32
    %c0_i32_0 = arith.constant 0 : i32
    %c0_i32_1 = arith.constant 0 : i32
    return %c0_i32, %c0_i32_0 : i32, i32
  }
  func.func @transform_7(%arg0: i32) -> (i32, i32) {
    %c0_i32 = arith.constant 0 : i32
    %c0_i32_0 = arith.constant 0 : i32
    return %c0_i32, %arg0 : i32, i32
  }
}

</mosaic_0001>

<llo_original>
// kernel: net_cifar10_forward.3
$region0: #{net_cifar10_forward.3}
  #allocation0 [shape = 'u32[]', space=smem, size = 0x4, offset = 0x4, fixed_abs, tag = 'smem constant byte address 0x4 - core index']
  #allocation1 [shape = 'u32[72,128]{1,0:T(1,128)}', space=vmem, size = 0x9000, scoped, tag = 'internal scratch']
  %s0 = inlined_call_operand.vmem [shape: bf16[2,128,1024], index: 0, kind: input, shape index: {}]
  %s1 = inlined_call_operand.vmem [shape: bf16[6,128], index: 1, kind: input, shape index: {}]
  %s2 = inlined_call_operand.vmem [shape: f32[6,1], index: 2, kind: input, shape index: {}]
  %s3 = inlined_call_operand.vmem [shape: bf16[6,512], index: 3, kind: output, shape index: {}]
  %s4 = sld [smem:[#allocation0]]
  $region45: #{net_cifar10_forward.3} parent=0
    _
  %s6 = ssub.s32 1, %s4
  %s7 = scalar_select 0, %s6, %s4
  loop: start=0, step=1, limit=4
  $region2: #{net_cifar10_forward.3} parent=0 // loop_pre_header
    _
  $region3: #{net_cifar10_forward.3} parent=0 // loop_header
    %s9 = sphi 0, %s13
    %p10 = scmp.ge.s32.totalorder %s9, 4
    %s19 = sphi 0, %s21
    %s22 = sphi 0, %s19
    %s23 = sphi 0, %s22
    %s39 = sphi 0, %s23
    %s43 = sphi 0, %s43
    %s45 = sphi 0, %s43
    %s46 = sphi 0, %s45
    %s60 = sphi 0, %s46
    %s64 = sphi 0, %s64
    %s66 = sphi 0, %s64
    %s67 = sphi 0, %s66
    %s81 = sphi 0, %s67
    %s87 = sphi 0, %s89
    %s90 = sphi 0, %s87
    %s91 = sphi 0, %s90
    %s107 = sphi 0, %s91
  $region4: #{net_cifar10_forward.3} parent=0 // loop_header_branch
    %12 = sbr.rel (%p10) target = $region8
  $region5: #{net_cifar10_forward.3} parent=0 // loop_body
    %s14 = ssub.s32 %s9, 1
    %s15 = ssub.s32 %s9, 2
    %s16 = sadd.s32 %s9, 1
    %s17 = ssub.s32 %s9, %s16
    %p18 = scmp.eq.s32.totalorder %s17, 0
    %s20 = sadd.s32 %s19, 1
    %s21 = scalar_select %p18, %s19, %s20
    %p24 = pneg %p18
    %p25 = scmp.eq.s32.totalorder %s9, 1
    %p26 = por %p24, %p25
    %p27 = scmp.ne.s32.totalorder %s19, %s22
    %p28 = scmp.eq.s32.totalorder %s9, 0
    %p29 = por %p27, %p28
    %p30 = scmp.ne.s32.totalorder %s19, %s22
    %p31 = scmp.eq.s32.totalorder %s14, 1
    %p32 = por %p30, %p31
    %p33 = scmp.ne.s32.totalorder %s22, %s23
    %p34 = scmp.eq.s32.totalorder %s14, 0
    %p35 = por %p33, %p34
    %p36 = scmp.ne.s32.totalorder %s22, %s23
    %p37 = scmp.eq.s32.totalorder %s15, 1
    %p38 = por %p36, %p37
    %p40 = scmp.ne.s32.totalorder %s23, %s39
    %p41 = scmp.eq.s32.totalorder %s15, 0
    %p42 = por %p40, %p41
    %s44 = sadd.s32 %s43, 1
    %p47 = scmp.eq.s32.totalorder %s9, 1
    %p48 = scmp.ne.s32.totalorder %s43, %s45
    %p49 = scmp.eq.s32.totalorder %s9, 0
    %p50 = por %p48, %p49
    %p51 = scmp.ne.s32.totalorder %s43, %s45
    %p52 = scmp.eq.s32.totalorder %s14, 1
    %p53 = por %p51, %p52
    %p54 = scmp.ne.s32.totalorder %s45, %s46
    %p55 = scmp.eq.s32.totalorder %s14, 0
    %p56 = por %p54, %p55
    %p57 = scmp.ne.s32.totalorder %s45, %s46
    %p58 = scmp.eq.s32.totalorder %s15, 1
    %p59 = por %p57, %p58
    %p61 = scmp.ne.s32.totalorder %s46, %s60
    %p62 = scmp.eq.s32.totalorder %s15, 0
    %p63 = por %p61, %p62
    %s65 = sadd.s32 %s64, 1
    %p68 = scmp.eq.s32.totalorder %s9, 1
    %p69 = scmp.ne.s32.totalorder %s64, %s66
    %p70 = scmp.eq.s32.totalorder %s9, 0
    %p71 = por %p69, %p70
    %p72 = scmp.ne.s32.totalorder %s64, %s66
    %p73 = scmp.eq.s32.totalorder %s14, 1
    %p74 = por %p72, %p73
    %p75 = scmp.ne.s32.totalorder %s66, %s67
    %p76 = scmp.eq.s32.totalorder %s14, 0
    %p77 = por %p75, %p76
    %p78 = scmp.ne.s32.totalorder %s66, %s67
    %p79 = scmp.eq.s32.totalorder %s15, 1
    %p80 = por %p78, %p79
    %p82 = scmp.ne.s32.totalorder %s67, %s81
    %p83 = scmp.eq.s32.totalorder %s15, 0
    %p84 = por %p82, %p83
    %s85 = ssub.s32 %s9, %s16
    %p86 = scmp.eq.s32.totalorder %s85, 0
    %s88 = sadd.s32 %s87, 1
    %s89 = scalar_select %p86, %s87, %s88
    %p92 = pneg %p86
    %p93 = scmp.eq.s32.totalorder %s9, 1
    %p94 = por %p92, %p93
    %p95 = scmp.ne.s32.totalorder %s87, %s90
    %p96 = scmp.eq.s32.totalorder %s9, 0
    %p97 = por %p95, %p96
    %p98 = scmp.ne.s32.totalorder %s87, %s90
    %p99 = scmp.eq.s32.totalorder %s14, 1
    %p100 = por %p98, %p99
    %p101 = scmp.ne.s32.totalorder %s90, %s91
    %p102 = scmp.eq.s32.totalorder %s14, 0
    %p103 = por %p101, %p102
    %p104 = scmp.ne.s32.totalorder %s90, %s91
    %p105 = scmp.eq.s32.totalorder %s15, 1
    %p106 = por %p104, %p105
    %p108 = scmp.ne.s32.totalorder %s91, %s107
    %p109 = scmp.eq.s32.totalorder %s15, 0
    %p110 = por %p108, %p109
    %p111 = scmp.le.s32.totalorder 1, %s9
    %p112 = scmp.lt.s32.totalorder %s9, 3
    %p113 = pnand %p111, %p112
    %p114 = pneg %p113
    // Predicated region
    $region9: #{net_cifar10_forward.3} parent=5 // pred_check
      _
    $region10: #{net_cifar10_forward.3} parent=5 // pred_check_branch
      %116 = sbr.rel (%p113) target = $region12
    $region11: #{net_cifar10_forward.3} parent=5 // pred_region
      %s117 = ssub.s32 %s9, 1
      // Predicated region
      $region13: #{net_cifar10_forward.3} parent=11 // pred_check
        %p118 = pneg %p56
      $region14: #{net_cifar10_forward.3} parent=11 // pred_check_branch
        %120 = sbr.rel (%p118) target = $region16
      $region15: #{net_cifar10_forward.3} parent=11 // pred_region
        _
      $region16: #{net_cifar10_forward.3} parent=11 // pred_fallthru
        _
      // Predicated region
      $region17: #{net_cifar10_forward.3} parent=11 // pred_check
        %p121 = pneg %p77
      $region18: #{net_cifar10_forward.3} parent=11 // pred_check_branch
        %123 = sbr.rel (%p121) target = $region20
      $region19: #{net_cifar10_forward.3} parent=11 // pred_region
        _
      $region20: #{net_cifar10_forward.3} parent=11 // pred_fallthru
        _
    $region12: #{net_cifar10_forward.3} parent=5 // pred_fallthru
      _
    %p124 = scmp.lt.s32.totalorder %s9, 2
    // Predicated region
    $region21: #{net_cifar10_forward.3} parent=5 // pred_check
      %p125 = pneg %p124
    $region22: #{net_cifar10_forward.3} parent=5 // pred_check_branch
      %127 = sbr.rel (%p125) target = $region24
    $region23: #{net_cifar10_forward.3} parent=5 // pred_region
      // Predicated region
      $region25: #{net_cifar10_forward.3} parent=23 // pred_check
        %p128 = pneg %p29
      $region26: #{net_cifar10_forward.3} parent=23 // pred_check_branch
        %130 = sbr.rel (%p128) target = $region28
      $region27: #{net_cifar10_forward.3} parent=23 // pred_region
        %p131 = scmp.lt.s32.totalorder %s9, 1
        %s132 = scalar_select %p131, %s9, 1
        %s133 = smul.addr %s132, 128
        %s134 = smul.addr %s133, 4
        %s135 = scalar_lea.vmem %s0, %s134
      $region28: #{net_cifar10_forward.3} parent=23 // pred_fallthru
        _
    $region24: #{net_cifar10_forward.3} parent=5 // pred_fallthru
      _
    %p136 = scmp.le.s32.totalorder 1, %s9
    %p137 = scmp.lt.s32.totalorder %s9, 3
    %p138 = pnand %p136, %p137
    %p139 = pneg %p138
    // Predicated region
    $region29: #{net_cifar10_forward.3} parent=5 // pred_check
      _
    $region30: #{net_cifar10_forward.3} parent=5 // pred_check_branch
      %141 = sbr.rel (%p138) target = $region32
    $region31: #{net_cifar10_forward.3} parent=5 // pred_region
      %s142 = ssub.s32 %s9, 1
      %p143 = scmp.lt.s32.totalorder %s14, 1
      %s144 = scalar_select %p143, %s14, 1
      %s145 = smul.addr %s144, 128
      %s146 = smul.addr %s145, 4
      %s147 = scalar_lea.vmem %s0, %s146
      %p148 = pneg %p35
      %p149 = pneg %p32
      %p150 = pneg %p56
      %p151 = pneg %p53
      %p152 = pneg %p77
      %p153 = pneg %p74
      %p154 = pneg %p103
      %p155 = pneg %p100
      %s156 = smul.u32 2, %s14
      %p157 = scmp.lt.s32.totalorder %s156, 3
      %s158 = scalar_select %p157, %s156, 3
      %s159 = smul.addr %s158, 4
      %s160 = scalar_lea.vmem %s3, %s159
      %p161 = scmp.lt.s32.totalorder %s14, 1
      %s162 = scalar_select %p161, %s14, 1
      %s163 = smul.addr %s162, 128
      %s164 = smul.addr %s163, 4
      %s165 = scalar_lea.vmem %s0, %s164
      %s166 = smul.u32 2, %s14
      %p167 = scmp.lt.s32.totalorder %s166, 3
      %s168 = scalar_select %p167, %s166, 3
      %s169 = smul.addr %s168, 4
      %s170 = scalar_lea.vmem %s3, %s169
      %s171 = smul.u32 2, %s14
      %v172 = vld [vmem:[%s1] sm:$0x7]
      %v173 = vld [vmem:[%s165] sm:$0xff]
      %v174 = vld [vmem:[%s165 + $0x8] sm:$0xff]
      %v175 = vld [vmem:[%s165 + $0x10] sm:$0xff]
      %v176 = vld [vmem:[%s165 + $0x18] sm:$0xff]
      %v177 = vld [vmem:[%s165 + $0x20] sm:$0xff]
      %v178 = vld [vmem:[%s165 + $0x28] sm:$0xff]
      %v179 = vld [vmem:[%s165 + $0x30] sm:$0xff]
      %v180 = vld [vmem:[%s165 + $0x38] sm:$0xff]
      %v181 = vld [vmem:[%s165 + $0x40] sm:$0xff]
      %v182 = vld [vmem:[%s165 + $0x48] sm:$0xff]
      %v183 = vld [vmem:[%s165 + $0x50] sm:$0xff]
      %v184 = vld [vmem:[%s165 + $0x58] sm:$0xff]
      %v185 = vld [vmem:[%s165 + $0x60] sm:$0xff]
      %v186 = vld [vmem:[%s165 + $0x68] sm:$0xff]
      %v187 = vld [vmem:[%s165 + $0x70] sm:$0xff]
      %v188 = vld [vmem:[%s165 + $0x78] sm:$0xff]
      %v189 = vld [vmem:[%s165 + $0x80] sm:$0xff]
      %v190 = vld [vmem:[%s165 + $0x88] sm:$0xff]
      %v191 = vld [vmem:[%s165 + $0x90] sm:$0xff]
      %v192 = vld [vmem:[%s165 + $0x98] sm:$0xff]
      %v193 = vld [vmem:[%s165 + $0xa0] sm:$0xff]
      %v194 = vld [vmem:[%s165 + $0xa8] sm:$0xff]
      %v195 = vld [vmem:[%s165 + $0xb0] sm:$0xff]
      %v196 = vld [vmem:[%s165 + $0xb8] sm:$0xff]
      %v197 = vld [vmem:[%s165 + $0xc0] sm:$0xff]
      %v198 = vld [vmem:[%s165 + $0xc8] sm:$0xff]
      %v199 = vld [vmem:[%s165 + $0xd0] sm:$0xff]
      %v200 = vld [vmem:[%s165 + $0xd8] sm:$0xff]
      %v201 = vld [vmem:[%s165 + $0xe0] sm:$0xff]
      %v202 = vld [vmem:[%s165 + $0xe8] sm:$0xff]
      %v203 = vld [vmem:[%s165 + $0xf0] sm:$0xff]
      %v204 = vld [vmem:[%s165 + $0xf8] sm:$0xff]
      %v205 = vld [vmem:[%s165 + $0x100] sm:$0xff]
      %v206 = vld [vmem:[%s165 + $0x108] sm:$0xff]
      %v207 = vld [vmem:[%s165 + $0x110] sm:$0xff]
      %v208 = vld [vmem:[%s165 + $0x118] sm:$0xff]
      %v209 = vld [vmem:[%s165 + $0x120] sm:$0xff]
      %v210 = vld [vmem:[%s165 + $0x128] sm:$0xff]
      %v211 = vld [vmem:[%s165 + $0x130] sm:$0xff]
      %v212 = vld [vmem:[%s165 + $0x138] sm:$0xff]
      %v213 = vld [vmem:[%s165 + $0x140] sm:$0xff]
      %v214 = vld [vmem:[%s165 + $0x148] sm:$0xff]
      %v215 = vld [vmem:[%s165 + $0x150] sm:$0xff]
      %v216 = vld [vmem:[%s165 + $0x158] sm:$0xff]
      %v217 = vld [vmem:[%s165 + $0x160] sm:$0xff]
      %v218 = vld [vmem:[%s165 + $0x168] sm:$0xff]
      %v219 = vld [vmem:[%s165 + $0x170] sm:$0xff]
      %v220 = vld [vmem:[%s165 + $0x178] sm:$0xff]
      %v221 = vld [vmem:[%s165 + $0x180] sm:$0xff]
      %v222 = vld [vmem:[%s165 + $0x188] sm:$0xff]
      %v223 = vld [vmem:[%s165 + $0x190] sm:$0xff]
      %v224 = vld [vmem:[%s165 + $0x198] sm:$0xff]
      %v225 = vld [vmem:[%s165 + $0x1a0] sm:$0xff]
      %v226 = vld [vmem:[%s165 + $0x1a8] sm:$0xff]
      %v227 = vld [vmem:[%s165 + $0x1b0] sm:$0xff]
      %v228 = vld [vmem:[%s165 + $0x1b8] sm:$0xff]
      %v229 = vld [vmem:[%s165 + $0x1c0] sm:$0xff]
      %v230 = vld [vmem:[%s165 + $0x1c8] sm:$0xff]
      %v231 = vld [vmem:[%s165 + $0x1d0] sm:$0xff]
      %v232 = vld [vmem:[%s165 + $0x1d8] sm:$0xff]
      %v233 = vld [vmem:[%s165 + $0x1e0] sm:$0xff]
      %v234 = vld [vmem:[%s165 + $0x1e8] sm:$0xff]
      %v235 = vld [vmem:[%s165 + $0x1f0] sm:$0xff]
      %v236 = vld [vmem:[%s165 + $0x1f8] sm:$0xff]
      %v301 = vunpack.c.l.b16 %v173
      %v302 = vunpack.c.h.b16 %v173
      %v303 = vunpack.c.l.b16 %v174
      %v304 = vunpack.c.h.b16 %v174
      %v305 = vunpack.c.l.b16 %v175
      %v306 = vunpack.c.h.b16 %v175
      %v307 = vunpack.c.l.b16 %v176
      %v308 = vunpack.c.h.b16 %v176
      %v309 = vunpack.c.l.b16 %v177
      %v310 = vunpack.c.h.b16 %v177
      %v311 = vunpack.c.l.b16 %v178
      %v312 = vunpack.c.h.b16 %v178
      %v313 = vunpack.c.l.b16 %v179
      %v314 = vunpack.c.h.b16 %v179
      %v315 = vunpack.c.l.b16 %v180
      %v316 = vunpack.c.h.b16 %v180
      %v317 = vunpack.c.l.b16 %v181
      %v318 = vunpack.c.h.b16 %v181
      %v319 = vunpack.c.l.b16 %v182
      %v320 = vunpack.c.h.b16 %v182
      %v321 = vunpack.c.l.b16 %v183
      %v322 = vunpack.c.h.b16 %v183
      %v323 = vunpack.c.l.b16 %v184
      %v324 = vunpack.c.h.b16 %v184
      %v325 = vunpack.c.l.b16 %v185
      %v326 = vunpack.c.h.b16 %v185
      %v327 = vunpack.c.l.b16 %v186
      %v328 = vunpack.c.h.b16 %v186
      %v329 = vunpack.c.l.b16 %v187
      %v330 = vunpack.c.h.b16 %v187
      %v331 = vunpack.c.l.b16 %v188
      %v332 = vunpack.c.h.b16 %v188
      %v333 = vunpack.c.l.b16 %v189
      %v334 = vunpack.c.h.b16 %v189
      %v335 = vunpack.c.l.b16 %v190
      %v336 = vunpack.c.h.b16 %v190
      %v337 = vunpack.c.l.b16 %v191
      %v338 = vunpack.c.h.b16 %v191
      %v339 = vunpack.c.l.b16 %v192
      %v340 = vunpack.c.h.b16 %v192
      %v341 = vunpack.c.l.b16 %v193
      %v342 = vunpack.c.h.b16 %v193
      %v343 = vunpack.c.l.b16 %v194
      %v344 = vunpack.c.h.b16 %v194
      %v345 = vunpack.c.l.b16 %v195
      %v346 = vunpack.c.h.b16 %v195
      %v347 = vunpack.c.l.b16 %v196
      %v348 = vunpack.c.h.b16 %v196
      %v349 = vunpack.c.l.b16 %v197
      %v350 = vunpack.c.h.b16 %v197
      %v351 = vunpack.c.l.b16 %v198
      %v352 = vunpack.c.h.b16 %v198
      %v353 = vunpack.c.l.b16 %v199
      %v354 = vunpack.c.h.b16 %v199
      %v355 = vunpack.c.l.b16 %v200
      %v356 = vunpack.c.h.b16 %v200
      %v357 = vunpack.c.l.b16 %v201
      %v358 = vunpack.c.h.b16 %v201
      %v359 = vunpack.c.l.b16 %v202
      %v360 = vunpack.c.h.b16 %v202
      %v361 = vunpack.c.l.b16 %v203
      %v362 = vunpack.c.h.b16 %v203
      %v363 = vunpack.c.l.b16 %v204
      %v364 = vunpack.c.h.b16 %v204
      %v365 = vunpack.c.l.b16 %v205
      %v366 = vunpack.c.h.b16 %v205
      %v367 = vunpack.c.l.b16 %v206
      %v368 = vunpack.c.h.b16 %v206
      %v369 = vunpack.c.l.b16 %v207
      %v370 = vunpack.c.h.b16 %v207
      %v371 = vunpack.c.l.b16 %v208
      %v372 = vunpack.c.h.b16 %v208
      %v373 = vunpack.c.l.b16 %v209
      %v374 = vunpack.c.h.b16 %v209
      %v375 = vunpack.c.l.b16 %v210
      %v376 = vunpack.c.h.b16 %v210
      %v377 = vunpack.c.l.b16 %v211
      %v378 = vunpack.c.h.b16 %v211
      %v379 = vunpack.c.l.b16 %v212
      %v380 = vunpack.c.h.b16 %v212
      %v381 = vunpack.c.l.b16 %v213
      %v382 = vunpack.c.h.b16 %v213
      %v383 = vunpack.c.l.b16 %v214
      %v384 = vunpack.c.h.b16 %v214
      %v385 = vunpack.c.l.b16 %v215
      %v386 = vunpack.c.h.b16 %v215
      %v387 = vunpack.c.l.b16 %v216
      %v388 = vunpack.c.h.b16 %v216
      %v389 = vunpack.c.l.b16 %v217
      %v390 = vunpack.c.h.b16 %v217
      %v391 = vunpack.c.l.b16 %v218
      %v392 = vunpack.c.h.b16 %v218
      %v393 = vunpack.c.l.b16 %v219
      %v394 = vunpack.c.h.b16 %v219
      %v395 = vunpack.c.l.b16 %v220
      %v396 = vunpack.c.h.b16 %v220
      %v397 = vunpack.c.l.b16 %v221
      %v398 = vunpack.c.h.b16 %v221
      %v399 = vunpack.c.l.b16 %v222
      %v400 = vunpack.c.h.b16 %v222
      %v401 = vunpack.c.l.b16 %v223
      %v402 = vunpack.c.h.b16 %v223
      %v403 = vunpack.c.l.b16 %v224
      %v404 = vunpack.c.h.b16 %v224
      %v405 = vunpack.c.l.b16 %v225
      %v406 = vunpack.c.h.b16 %v225
      %v407 = vunpack.c.l.b16 %v226
      %v408 = vunpack.c.h.b16 %v226
      %v409 = vunpack.c.l.b16 %v227
      %v410 = vunpack.c.h.b16 %v227
      %v411 = vunpack.c.l.b16 %v228
      %v412 = vunpack.c.h.b16 %v228
      %v413 = vunpack.c.l.b16 %v229
      %v414 = vunpack.c.h.b16 %v229
      %v415 = vunpack.c.l.b16 %v230
      %v416 = vunpack.c.h.b16 %v230
      %v417 = vunpack.c.l.b16 %v231
      %v418 = vunpack.c.h.b16 %v231
      %v419 = vunpack.c.l.b16 %v232
      %v420 = vunpack.c.h.b16 %v232
      %v421 = vunpack.c.l.b16 %v233
      %v422 = vunpack.c.h.b16 %v233
      %v423 = vunpack.c.l.b16 %v234
      %v424 = vunpack.c.h.b16 %v234
      %v425 = vunpack.c.l.b16 %v235
      %v426 = vunpack.c.h.b16 %v235
      %v427 = vunpack.c.l.b16 %v236
      %v428 = vunpack.c.h.b16 %v236
      %v429 = vpack.c.b16 %v309, %v301
      %v430 = vpack.c.b16 %v310, %v302
      %v431 = vpack.c.b16 %v311, %v303
      %v432 = vpack.c.b16 %v312, %v304
      %v433 = vpack.c.b16 %v313, %v305
      %v434 = vpack.c.b16 %v314, %v306
      %v435 = vpack.c.b16 %v315, %v307
      %v436 = vpack.c.b16 %v316, %v308
      %v437 = vpack.c.b16 %v325, %v317
      %v438 = vpack.c.b16 %v326, %v318
      %v439 = vpack.c.b16 %v327, %v319
      %v440 = vpack.c.b16 %v328, %v320
      %v441 = vpack.c.b16 %v329, %v321
      %v442 = vpack.c.b16 %v330, %v322
      %v443 = vpack.c.b16 %v331, %v323
      %v444 = vpack.c.b16 %v332, %v324
      %v445 = vpack.c.b16 %v341, %v333
      %v446 = vpack.c.b16 %v342, %v334
      %v447 = vpack.c.b16 %v343, %v335
      %v448 = vpack.c.b16 %v344, %v336
      %v449 = vpack.c.b16 %v345, %v337
      %v450 = vpack.c.b16 %v346, %v338
      %v451 = vpack.c.b16 %v347, %v339
      %v452 = vpack.c.b16 %v348, %v340
      %v453 = vpack.c.b16 %v357, %v349
      %v454 = vpack.c.b16 %v358, %v350
      %v455 = vpack.c.b16 %v359, %v351
      %v456 = vpack.c.b16 %v360, %v352
      %v457 = vpack.c.b16 %v361, %v353
      %v458 = vpack.c.b16 %v362, %v354
      %v459 = vpack.c.b16 %v363, %v355
      %v460 = vpack.c.b16 %v364, %v356
      %v461 = vpack.c.b16 %v373, %v365
      %v462 = vpack.c.b16 %v374, %v366
      %v463 = vpack.c.b16 %v375, %v367
      %v464 = vpack.c.b16 %v376, %v368
      %v465 = vpack.c.b16 %v377, %v369
      %v466 = vpack.c.b16 %v378, %v370
      %v467 = vpack.c.b16 %v379, %v371
      %v468 = vpack.c.b16 %v380, %v372
      %v469 = vpack.c.b16 %v389, %v381
      %v470 = vpack.c.b16 %v390, %v382
      %v471 = vpack.c.b16 %v391, %v383
      %v472 = vpack.c.b16 %v392, %v384
      %v473 = vpack.c.b16 %v393, %v385
      %v474 = vpack.c.b16 %v394, %v386
      %v475 = vpack.c.b16 %v395, %v387
      %v476 = vpack.c.b16 %v396, %v388
      %v477 = vpack.c.b16 %v405, %v397
      %v478 = vpack.c.b16 %v406, %v398
      %v479 = vpack.c.b16 %v407, %v399
      %v480 = vpack.c.b16 %v408, %v400
      %v481 = vpack.c.b16 %v409, %v401
      %v482 = vpack.c.b16 %v410, %v402
      %v483 = vpack.c.b16 %v411, %v403
      %v484 = vpack.c.b16 %v412, %v404
      %v485 = vpack.c.b16 %v421, %v413
      %v486 = vpack.c.b16 %v422, %v414
      %v487 = vpack.c.b16 %v423, %v415
      %v488 = vpack.c.b16 %v424, %v416
      %v489 = vpack.c.b16 %v425, %v417
      %v490 = vpack.c.b16 %v426, %v418
      %v491 = vpack.c.b16 %v427, %v419
      %v492 = vpack.c.b16 %v428, %v420
      %557 = vmatpush.bf16.msra.mxu0 %v485
      %558 = vmatpush.bf16.msra.mxu0 %v477
      %559 = vmatpush.bf16.msra.mxu0 %v469
      %560 = vmatpush.bf16.msra.mxu0 %v461
      %561 = vmatpush.bf16.msra.mxu0 %v453
      %562 = vmatpush.bf16.msra.mxu0 %v445
      %563 = vmatpush.bf16.msra.mxu0 %v437
      %564 = vmatpush.bf16.msra.mxu0 %v429
      %565 = vmatmul.bf16.gmra.mxu0 %v172
      %v566 = vpop.f32.mrf.mxu0
      %v567 = vadd.f32 0.0, %v566
      %v568 = vpop.f32.mrf.mxu0
      %569 = vdwg.mxu0
      %570 = vmatpush.bf16.msra.mxu0 %v486
      %571 = vmatpush.bf16.msra.mxu0 %v478
      %572 = vmatpush.bf16.msra.mxu0 %v470
      %573 = vmatpush.bf16.msra.mxu0 %v462
      %574 = vmatpush.bf16.msra.mxu0 %v454
      %575 = vmatpush.bf16.msra.mxu0 %v446
      %576 = vmatpush.bf16.msra.mxu0 %v438
      %577 = vmatpush.bf16.msra.mxu0 %v430
      %578 = vmatmul.bf16.gmra.mxu0 %v172
      %v579 = vpop.f32.mrf.mxu0
      %v580 = vadd.f32 0.0, %v579
      %v581 = vpop.f32.mrf.mxu0
      %582 = vdwg.mxu0
      %583 = vmatpush.bf16.msra.mxu0 %v487
      %584 = vmatpush.bf16.msra.mxu0 %v479
      %585 = vmatpush.bf16.msra.mxu0 %v471
      %586 = vmatpush.bf16.msra.mxu0 %v463
      %587 = vmatpush.bf16.msra.mxu0 %v455
      %588 = vmatpush.bf16.msra.mxu0 %v447
      %589 = vmatpush.bf16.msra.mxu0 %v439
      %590 = vmatpush.bf16.msra.mxu0 %v431
      %591 = vmatmul.bf16.gmra.mxu0 %v172
      %v592 = vpop.f32.mrf.mxu0
      %v593 = vadd.f32 0.0, %v592
      %v594 = vpop.f32.mrf.mxu0
      %595 = vdwg.mxu0
      %596 = vmatpush.bf16.msra.mxu0 %v488
      %597 = vmatpush.bf16.msra.mxu0 %v480
      %598 = vmatpush.bf16.msra.mxu0 %v472
      %599 = vmatpush.bf16.msra.mxu0 %v464
      %600 = vmatpush.bf16.msra.mxu0 %v456
      %601 = vmatpush.bf16.msra.mxu0 %v448
      %602 = vmatpush.bf16.msra.mxu0 %v440
      %603 = vmatpush.bf16.msra.mxu0 %v432
      %604 = vmatmul.bf16.gmra.mxu0 %v172
      %v605 = vpop.f32.mrf.mxu0
      %v606 = vadd.f32 0.0, %v605
      %v607 = vpop.f32.mrf.mxu0
      %608 = vdwg.mxu0
      %609 = vmatpush.bf16.msra.mxu0 %v489
      %610 = vmatpush.bf16.msra.mxu0 %v481
      %611 = vmatpush.bf16.msra.mxu0 %v473
      %612 = vmatpush.bf16.msra.mxu0 %v465
      %613 = vmatpush.bf16.msra.mxu0 %v457
      %614 = vmatpush.bf16.msra.mxu0 %v449
      %615 = vmatpush.bf16.msra.mxu0 %v441
      %616 = vmatpush.bf16.msra.mxu0 %v433
      %617 = vmatmul.bf16.gmra.mxu0 %v172
      %v618 = vpop.f32.mrf.mxu0
      %v619 = vadd.f32 0.0, %v618
      %v620 = vpop.f32.mrf.mxu0
      %621 = vdwg.mxu0
      %622 = vmatpush.bf16.msra.mxu0 %v490
      %623 = vmatpush.bf16.msra.mxu0 %v482
      %624 = vmatpush.bf16.msra.mxu0 %v474
      %625 = vmatpush.bf16.msra.mxu0 %v466
      %626 = vmatpush.bf16.msra.mxu0 %v458
      %627 = vmatpush.bf16.msra.mxu0 %v450
      %628 = vmatpush.bf16.msra.mxu0 %v442
      %629 = vmatpush.bf16.msra.mxu0 %v434
      %630 = vmatmul.bf16.gmra.mxu0 %v172
      %v631 = vpop.f32.mrf.mxu0
      %v632 = vadd.f32 0.0, %v631
      %v633 = vpop.f32.mrf.mxu0
      %634 = vdwg.mxu0
      %635 = vmatpush.bf16.msra.mxu0 %v491
      %636 = vmatpush.bf16.msra.mxu0 %v483
      %637 = vmatpush.bf16.msra.mxu0 %v475
      %638 = vmatpush.bf16.msra.mxu0 %v467
      %639 = vmatpush.bf16.msra.mxu0 %v459
      %640 = vmatpush.bf16.msra.mxu0 %v451
      %641 = vmatpush.bf16.msra.mxu0 %v443
      %642 = vmatpush.bf16.msra.mxu0 %v435
      %643 = vmatmul.bf16.gmra.mxu0 %v172
      %v644 = vpop.f32.mrf.mxu0
      %v645 = vadd.f32 0.0, %v644
      %v646 = vpop.f32.mrf.mxu0
      %647 = vdwg.mxu0
      %648 = vmatpush.bf16.msra.mxu0 %v492
      %649 = vmatpush.bf16.msra.mxu0 %v484
      %650 = vmatpush.bf16.msra.mxu0 %v476
      %651 = vmatpush.bf16.msra.mxu0 %v468
      %652 = vmatpush.bf16.msra.mxu0 %v460
      %653 = vmatpush.bf16.msra.mxu0 %v452
      %654 = vmatpush.bf16.msra.mxu0 %v444
      %655 = vmatpush.bf16.msra.mxu0 %v436
      %656 = vmatmul.bf16.gmra.mxu0 %v172
      %v657 = vpop.f32.mrf.mxu0
      %v658 = vadd.f32 0.0, %v657
      %v659 = vpop.f32.mrf.mxu0
      %660 = vdwg.mxu0
      %v661 = vmax.f32 %v567, %v593
      %v662 = vmax.f32 %v580, %v606
      %v663 = vmax.f32 %v661, %v619
      %v664 = vmax.f32 %v662, %v632
      %v665 = vmax.f32 %v663, %v645
      %v666 = vmax.f32 %v664, %v658
      %v667 = vld [vmem:[%s2] sm:$0x3f]
      %669 = vset.pattern.permute.xlu0 0
      %670 = vperm.xlu0 %669, %v667
      %v671 = vpop.permute.xlu0 %670
      %v673 = vadd.f32 %v665, %v671
      %v674 = vadd.f32 %v666, %v671
      %v675 = vmax.f32 %v673, 0.0
      %v676 = vmax.f32 %v674, 0.0
      %v677 = vpack.c.bf16 %v676, %v675
      %678 = vst [vmem:[%s170] sm:$0x77] %v677
      %s679 = smul.u32 2, %s14
      %p680 = scmp.lt.s32.totalorder %s679, 3
      %s681 = scalar_select %p680, %s679, 3
      %s682 = smul.addr %s681, 4
      %s683 = scalar_lea.vmem %s3, %s682
      // Predicated region
      $region33: #{net_cifar10_forward.3} parent=31 // pred_check
        %p684 = pneg %p100
      $region34: #{net_cifar10_forward.3} parent=31 // pred_check_branch
        %686 = sbr.rel (%p684) target = $region36
      $region35: #{net_cifar10_forward.3} parent=31 // pred_region
        %s687 = smul.u32 2, %s14
      $region36: #{net_cifar10_forward.3} parent=31 // pred_fallthru
        _
    $region32: #{net_cifar10_forward.3} parent=5 // pred_fallthru
      _
    %p688 = scmp.le.s32.totalorder 2, %s9
    // Predicated region
    $region37: #{net_cifar10_forward.3} parent=5 // pred_check
      %p689 = pneg %p688
    $region38: #{net_cifar10_forward.3} parent=5 // pred_check_branch
      %691 = sbr.rel (%p689) target = $region40
    $region39: #{net_cifar10_forward.3} parent=5 // pred_region
      %s692 = ssub.s32 %s9, 2
      // Predicated region
      $region41: #{net_cifar10_forward.3} parent=39 // pred_check
        %p693 = pneg %p106
      $region42: #{net_cifar10_forward.3} parent=39 // pred_check_branch
        %695 = sbr.rel (%p693) target = $region44
      $region43: #{net_cifar10_forward.3} parent=39 // pred_region
        %s696 = smul.u32 2, %s15
        %p697 = scmp.lt.s32.totalorder %s696, 3
        %s698 = scalar_select %p697, %s696, 3
        %s699 = smul.addr %s698, 4
        %s700 = scalar_lea.vmem %s3, %s699
      $region44: #{net_cifar10_forward.3} parent=39 // pred_fallthru
        _
    $region40: #{net_cifar10_forward.3} parent=5 // pred_fallthru
      _
  $region6: #{net_cifar10_forward.3} parent=0 // loop_footer
    %s13 = sadd.s32 1, %s9
  $region7: #{net_cifar10_forward.3} parent=0 // loop_footer_branch
    %8 = sbr.rel target = $region3
  $region8: #{net_cifar10_forward.3} parent=0 // loop_exit
    _

// kernel: net_cifar10_forward.4
$region0: #{net_cifar10_forward.4}
  #allocation0 [shape = 'u32[]', space=smem, size = 0x4, offset = 0x4, fixed_abs, tag = 'smem constant byte address 0x4 - core index']
  #allocation1 [shape = 'u32[72,128]{1,0:T(1,128)}', space=vmem, size = 0x9000, scoped, tag = 'internal scratch']
  %s0 = inlined_call_operand.vmem [shape: bf16[1,256,512], index: 0, kind: input, shape index: {}]
  %s1 = inlined_call_operand.vmem [shape: bf16[16,256], index: 1, kind: input, shape index: {}]
  %s2 = inlined_call_operand.vmem [shape: f32[16,1], index: 2, kind: input, shape index: {}]
  %s3 = inlined_call_operand.vmem [shape: f32[16,128], index: 3, kind: output, shape index: {}]
  %s4 = sld [smem:[#allocation0]]
  $region22: #{net_cifar10_forward.4} parent=0
    _
  %s6 = ssub.s32 1, %s4
  %s7 = scalar_select 0, %s6, %s4
  // Predicated region
  $region2: #{net_cifar10_forward.4} parent=0 // pred_check
    _
  $region3: #{net_cifar10_forward.4} parent=0 // pred_check_branch
    %9 = sbr.rel (0) target = $region5
  $region4: #{net_cifar10_forward.4} parent=0 // pred_region
    _
  $region5: #{net_cifar10_forward.4} parent=0 // pred_fallthru
    _
  // Predicated region
  $region6: #{net_cifar10_forward.4} parent=0 // pred_check
    _
  $region7: #{net_cifar10_forward.4} parent=0 // pred_check_branch
    %11 = sbr.rel (0) target = $region9
  $region8: #{net_cifar10_forward.4} parent=0 // pred_region
    _
  $region9: #{net_cifar10_forward.4} parent=0 // pred_fallthru
    _
  // Predicated region
  $region10: #{net_cifar10_forward.4} parent=0 // pred_check
    _
  $region11: #{net_cifar10_forward.4} parent=0 // pred_check_branch
    %13 = sbr.rel (0) target = $region13
  $region12: #{net_cifar10_forward.4} parent=0 // pred_region
    _
  $region13: #{net_cifar10_forward.4} parent=0 // pred_fallthru
    _
  %v14 = vld [vmem:[%s1] sm:$0xff]
  %v15 = vld [vmem:[%s1 + $0x8] sm:$0xff]
  %v16 = vld [vmem:[%s0] sm:$0xff]
  %v17 = vld [vmem:[%s0 + $0x8] sm:$0xff]
  %v18 = vld [vmem:[%s0 + $0x10] sm:$0xff]
  %v19 = vld [vmem:[%s0 + $0x18] sm:$0xff]
  %v20 = vld [vmem:[%s0 + $0x20] sm:$0xff]
  %v21 = vld [vmem:[%s0 + $0x28] sm:$0xff]
  %v22 = vld [vmem:[%s0 + $0x30] sm:$0xff]
  %v23 = vld [vmem:[%s0 + $0x38] sm:$0xff]
  %v24 = vld [vmem:[%s0 + $0x40] sm:$0xff]
  %v25 = vld [vmem:[%s0 + $0x48] sm:$0xff]
  %v26 = vld [vmem:[%s0 + $0x50] sm:$0xff]
  %v27 = vld [vmem:[%s0 + $0x58] sm:$0xff]
  %v28 = vld [vmem:[%s0 + $0x60] sm:$0xff]
  %v29 = vld [vmem:[%s0 + $0x68] sm:$0xff]
  %v30 = vld [vmem:[%s0 + $0x70] sm:$0xff]
  %v31 = vld [vmem:[%s0 + $0x78] sm:$0xff]
  %v32 = vld [vmem:[%s0 + $0x80] sm:$0xff]
  %v33 = vld [vmem:[%s0 + $0x88] sm:$0xff]
  %v34 = vld [vmem:[%s0 + $0x90] sm:$0xff]
  %v35 = vld [vmem:[%s0 + $0x98] sm:$0xff]
  %v36 = vld [vmem:[%s0 + $0xa0] sm:$0xff]
  %v37 = vld [vmem:[%s0 + $0xa8] sm:$0xff]
  %v38 = vld [vmem:[%s0 + $0xb0] sm:$0xff]
  %v39 = vld [vmem:[%s0 + $0xb8] sm:$0xff]
  %v40 = vld [vmem:[%s0 + $0xc0] sm:$0xff]
  %v41 = vld [vmem:[%s0 + $0xc8] sm:$0xff]
  %v42 = vld [vmem:[%s0 + $0xd0] sm:$0xff]
  %v43 = vld [vmem:[%s0 + $0xd8] sm:$0xff]
  %v44 = vld [vmem:[%s0 + $0xe0] sm:$0xff]
  %v45 = vld [vmem:[%s0 + $0xe8] sm:$0xff]
  %v46 = vld [vmem:[%s0 + $0xf0] sm:$0xff]
  %v47 = vld [vmem:[%s0 + $0xf8] sm:$0xff]
  %v48 = vld [vmem:[%s0 + $0x100] sm:$0xff]
  %v49 = vld [vmem:[%s0 + $0x108] sm:$0xff]
  %v50 = vld [vmem:[%s0 + $0x110] sm:$0xff]
  %v51 = vld [vmem:[%s0 + $0x118] sm:$0xff]
  %v52 = vld [vmem:[%s0 + $0x120] sm:$0xff]
  %v53 = vld [vmem:[%s0 + $0x128] sm:$0xff]
  %v54 = vld [vmem:[%s0 + $0x130] sm:$0xff]
  %v55 = vld [vmem:[%s0 + $0x138] sm:$0xff]
  %v56 = vld [vmem:[%s0 + $0x140] sm:$0xff]
  %v57 = vld [vmem:[%s0 + $0x148] sm:$0xff]
  %v58 = vld [vmem:[%s0 + $0x150] sm:$0xff]
  %v59 = vld [vmem:[%s0 + $0x158] sm:$0xff]
  %v60 = vld [vmem:[%s0 + $0x160] sm:$0xff]
  %v61 = vld [vmem:[%s0 + $0x168] sm:$0xff]
  %v62 = vld [vmem:[%s0 + $0x170] sm:$0xff]
  %v63 = vld [vmem:[%s0 + $0x178] sm:$0xff]
  %v64 = vld [vmem:[%s0 + $0x180] sm:$0xff]
  %v65 = vld [vmem:[%s0 + $0x188] sm:$0xff]
  %v66 = vld [vmem:[%s0 + $0x190] sm:$0xff]
  %v67 = vld [vmem:[%s0 + $0x198] sm:$0xff]
  %v68 = vld [vmem:[%s0 + $0x1a0] sm:$0xff]
  %v69 = vld [vmem:[%s0 + $0x1a8] sm:$0xff]
  %v70 = vld [vmem:[%s0 + $0x1b0] sm:$0xff]
  %v71 = vld [vmem:[%s0 + $0x1b8] sm:$0xff]
  %v72 = vld [vmem:[%s0 + $0x1c0] sm:$0xff]
  %v73 = vld [vmem:[%s0 + $0x1c8] sm:$0xff]
  %v74 = vld [vmem:[%s0 + $0x1d0] sm:$0xff]
  %v75 = vld [vmem:[%s0 + $0x1d8] sm:$0xff]
  %v76 = vld [vmem:[%s0 + $0x1e0] sm:$0xff]
  %v77 = vld [vmem:[%s0 + $0x1e8] sm:$0xff]
  %v78 = vld [vmem:[%s0 + $0x1f0] sm:$0xff]
  %v79 = vld [vmem:[%s0 + $0x1f8] sm:$0xff]
  %v82 = vunpack.c.l.b16 %v14
  %v83 = vunpack.c.h.b16 %v14
  %v84 = vunpack.c.l.b16 %v15
  %v85 = vunpack.c.h.b16 %v15
  %v86 = vpack.c.b16 %v84, %v82
  %v87 = vpack.c.b16 %v85, %v83
  %v154 = vunpack.c.l.b16 %v16
  %v155 = vunpack.c.h.b16 %v16
  %v156 = vunpack.c.l.b16 %v17
  %v157 = vunpack.c.h.b16 %v17
  %v158 = vunpack.c.l.b16 %v18
  %v159 = vunpack.c.h.b16 %v18
  %v160 = vunpack.c.l.b16 %v19
  %v161 = vunpack.c.h.b16 %v19
  %v162 = vunpack.c.l.b16 %v20
  %v163 = vunpack.c.h.b16 %v20
  %v164 = vunpack.c.l.b16 %v21
  %v165 = vunpack.c.h.b16 %v21
  %v166 = vunpack.c.l.b16 %v22
  %v167 = vunpack.c.h.b16 %v22
  %v168 = vunpack.c.l.b16 %v23
  %v169 = vunpack.c.h.b16 %v23
  %v170 = vunpack.c.l.b16 %v24
  %v171 = vunpack.c.h.b16 %v24
  %v172 = vunpack.c.l.b16 %v25
  %v173 = vunpack.c.h.b16 %v25
  %v174 = vunpack.c.l.b16 %v26
  %v175 = vunpack.c.h.b16 %v26
  %v176 = vunpack.c.l.b16 %v27
  %v177 = vunpack.c.h.b16 %v27
  %v178 = vunpack.c.l.b16 %v28
  %v179 = vunpack.c.h.b16 %v28
  %v180 = vunpack.c.l.b16 %v29
  %v181 = vunpack.c.h.b16 %v29
  %v182 = vunpack.c.l.b16 %v30
  %v183 = vunpack.c.h.b16 %v30
  %v184 = vunpack.c.l.b16 %v31
  %v185 = vunpack.c.h.b16 %v31
  %v186 = vunpack.c.l.b16 %v32
  %v187 = vunpack.c.h.b16 %v32
  %v188 = vunpack.c.l.b16 %v33
  %v189 = vunpack.c.h.b16 %v33
  %v190 = vunpack.c.l.b16 %v34
  %v191 = vunpack.c.h.b16 %v34
  %v192 = vunpack.c.l.b16 %v35
  %v193 = vunpack.c.h.b16 %v35
  %v194 = vunpack.c.l.b16 %v36
  %v195 = vunpack.c.h.b16 %v36
  %v196 = vunpack.c.l.b16 %v37
  %v197 = vunpack.c.h.b16 %v37
  %v198 = vunpack.c.l.b16 %v38
  %v199 = vunpack.c.h.b16 %v38
  %v200 = vunpack.c.l.b16 %v39
  %v201 = vunpack.c.h.b16 %v39
  %v202 = vunpack.c.l.b16 %v40
  %v203 = vunpack.c.h.b16 %v40
  %v204 = vunpack.c.l.b16 %v41
  %v205 = vunpack.c.h.b16 %v41
  %v206 = vunpack.c.l.b16 %v42
  %v207 = vunpack.c.h.b16 %v42
  %v208 = vunpack.c.l.b16 %v43
  %v209 = vunpack.c.h.b16 %v43
  %v210 = vunpack.c.l.b16 %v44
  %v211 = vunpack.c.h.b16 %v44
  %v212 = vunpack.c.l.b16 %v45
  %v213 = vunpack.c.h.b16 %v45
  %v214 = vunpack.c.l.b16 %v46
  %v215 = vunpack.c.h.b16 %v46
  %v216 = vunpack.c.l.b16 %v47
  %v217 = vunpack.c.h.b16 %v47
  %v218 = vunpack.c.l.b16 %v48
  %v219 = vunpack.c.h.b16 %v48
  %v220 = vunpack.c.l.b16 %v49
  %v221 = vunpack.c.h.b16 %v49
  %v222 = vunpack.c.l.b16 %v50
  %v223 = vunpack.c.h.b16 %v50
  %v224 = vunpack.c.l.b16 %v51
  %v225 = vunpack.c.h.b16 %v51
  %v226 = vunpack.c.l.b16 %v52
  %v227 = vunpack.c.h.b16 %v52
  %v228 = vunpack.c.l.b16 %v53
  %v229 = vunpack.c.h.b16 %v53
  %v230 = vunpack.c.l.b16 %v54
  %v231 = vunpack.c.h.b16 %v54
  %v232 = vunpack.c.l.b16 %v55
  %v233 = vunpack.c.h.b16 %v55
  %v234 = vunpack.c.l.b16 %v56
  %v235 = vunpack.c.h.b16 %v56
  %v236 = vunpack.c.l.b16 %v57
  %v237 = vunpack.c.h.b16 %v57
  %v238 = vunpack.c.l.b16 %v58
  %v239 = vunpack.c.h.b16 %v58
  %v240 = vunpack.c.l.b16 %v59
  %v241 = vunpack.c.h.b16 %v59
  %v242 = vunpack.c.l.b16 %v60
  %v243 = vunpack.c.h.b16 %v60
  %v244 = vunpack.c.l.b16 %v61
  %v245 = vunpack.c.h.b16 %v61
  %v246 = vunpack.c.l.b16 %v62
  %v247 = vunpack.c.h.b16 %v62
  %v248 = vunpack.c.l.b16 %v63
  %v249 = vunpack.c.h.b16 %v63
  %v250 = vunpack.c.l.b16 %v64
  %v251 = vunpack.c.h.b16 %v64
  %v252 = vunpack.c.l.b16 %v65
  %v253 = vunpack.c.h.b16 %v65
  %v254 = vunpack.c.l.b16 %v66
  %v255 = vunpack.c.h.b16 %v66
  %v256 = vunpack.c.l.b16 %v67
  %v257 = vunpack.c.h.b16 %v67
  %v258 = vunpack.c.l.b16 %v68
  %v259 = vunpack.c.h.b16 %v68
  %v260 = vunpack.c.l.b16 %v69
  %v261 = vunpack.c.h.b16 %v69
  %v262 = vunpack.c.l.b16 %v70
  %v263 = vunpack.c.h.b16 %v70
  %v264 = vunpack.c.l.b16 %v71
  %v265 = vunpack.c.h.b16 %v71
  %v266 = vunpack.c.l.b16 %v72
  %v267 = vunpack.c.h.b16 %v72
  %v268 = vunpack.c.l.b16 %v73
  %v269 = vunpack.c.h.b16 %v73
  %v270 = vunpack.c.l.b16 %v74
  %v271 = vunpack.c.h.b16 %v74
  %v272 = vunpack.c.l.b16 %v75
  %v273 = vunpack.c.h.b16 %v75
  %v274 = vunpack.c.l.b16 %v76
  %v275 = vunpack.c.h.b16 %v76
  %v276 = vunpack.c.l.b16 %v77
  %v277 = vunpack.c.h.b16 %v77
  %v278 = vunpack.c.l.b16 %v78
  %v279 = vunpack.c.h.b16 %v78
  %v280 = vunpack.c.l.b16 %v79
  %v281 = vunpack.c.h.b16 %v79
  %v282 = vpack.c.b16 %v158, %v154
  %v283 = vpack.c.b16 %v159, %v155
  %v284 = vpack.c.b16 %v160, %v156
  %v285 = vpack.c.b16 %v161, %v157
  %v286 = vpack.c.b16 %v166, %v162
  %v287 = vpack.c.b16 %v167, %v163
  %v288 = vpack.c.b16 %v168, %v164
  %v289 = vpack.c.b16 %v169, %v165
  %v290 = vpack.c.b16 %v174, %v170
  %v291 = vpack.c.b16 %v175, %v171
  %v292 = vpack.c.b16 %v176, %v172
  %v293 = vpack.c.b16 %v177, %v173
  %v294 = vpack.c.b16 %v182, %v178
  %v295 = vpack.c.b16 %v183, %v179
  %v296 = vpack.c.b16 %v184, %v180
  %v297 = vpack.c.b16 %v185, %v181
  %v298 = vpack.c.b16 %v190, %v186
  %v299 = vpack.c.b16 %v191, %v187
  %v300 = vpack.c.b16 %v192, %v188
  %v301 = vpack.c.b16 %v193, %v189
  %v302 = vpack.c.b16 %v198, %v194
  %v303 = vpack.c.b16 %v199, %v195
  %v304 = vpack.c.b16 %v200, %v196
  %v305 = vpack.c.b16 %v201, %v197
  %v306 = vpack.c.b16 %v206, %v202
  %v307 = vpack.c.b16 %v207, %v203
  %v308 = vpack.c.b16 %v208, %v204
  %v309 = vpack.c.b16 %v209, %v205
  %v310 = vpack.c.b16 %v214, %v210
  %v311 = vpack.c.b16 %v215, %v211
  %v312 = vpack.c.b16 %v216, %v212
  %v313 = vpack.c.b16 %v217, %v213
  %v314 = vpack.c.b16 %v222, %v218
  %v315 = vpack.c.b16 %v223, %v219
  %v316 = vpack.c.b16 %v224, %v220
  %v317 = vpack.c.b16 %v225, %v221
  %v318 = vpack.c.b16 %v230, %v226
  %v319 = vpack.c.b16 %v231, %v227
  %v320 = vpack.c.b16 %v232, %v228
  %v321 = vpack.c.b16 %v233, %v229
  %v322 = vpack.c.b16 %v238, %v234
  %v323 = vpack.c.b16 %v239, %v235
  %v324 = vpack.c.b16 %v240, %v236
  %v325 = vpack.c.b16 %v241, %v237
  %v326 = vpack.c.b16 %v246, %v242
  %v327 = vpack.c.b16 %v247, %v243
  %v328 = vpack.c.b16 %v248, %v244
  %v329 = vpack.c.b16 %v249, %v245
  %v330 = vpack.c.b16 %v254, %v250
  %v331 = vpack.c.b16 %v255, %v251
  %v332 = vpack.c.b16 %v256, %v252
  %v333 = vpack.c.b16 %v257, %v253
  %v334 = vpack.c.b16 %v262, %v258
  %v335 = vpack.c.b16 %v263, %v259
  %v336 = vpack.c.b16 %v264, %v260
  %v337 = vpack.c.b16 %v265, %v261
  %v338 = vpack.c.b16 %v270, %v266
  %v339 = vpack.c.b16 %v271, %v267
  %v340 = vpack.c.b16 %v272, %v268
  %v341 = vpack.c.b16 %v273, %v269
  %v342 = vpack.c.b16 %v278, %v274
  %v343 = vpack.c.b16 %v279, %v275
  %v344 = vpack.c.b16 %v280, %v276
  %v345 = vpack.c.b16 %v281, %v277
  %410 = vmatpush.bf16.msra.mxu0 %v310
  %411 = vmatpush.bf16.msra.mxu0 %v306
  %412 = vmatpush.bf16.msra.mxu0 %v302
  %413 = vmatpush.bf16.msra.mxu0 %v298
  %414 = vmatpush.bf16.msra.mxu0 %v294
  %415 = vmatpush.bf16.msra.mxu0 %v290
  %416 = vmatpush.bf16.msra.mxu0 %v286
  %417 = vmatpush.bf16.msra.mxu0 %v282
  %418 = vmatmul.bf16.gmra.mxu0 %v86
  %v419 = vpop.f32.mrf.mxu0
  %v420 = vadd.f32 0.0, %v419
  %v421 = vpop.f32.mrf.mxu0
  %v422 = vadd.f32 0.0, %v421
  %423 = vdwg.mxu0
  %424 = vmatpush.bf16.msra.mxu0 %v342
  %425 = vmatpush.bf16.msra.mxu0 %v338
  %426 = vmatpush.bf16.msra.mxu0 %v334
  %427 = vmatpush.bf16.msra.mxu0 %v330
  %428 = vmatpush.bf16.msra.mxu0 %v326
  %429 = vmatpush.bf16.msra.mxu0 %v322
  %430 = vmatpush.bf16.msra.mxu0 %v318
  %431 = vmatpush.bf16.msra.mxu0 %v314
  %432 = vmatmul.bf16.gmra.mxu0 %v87
  %v433 = vpop.f32.mrf.mxu0
  %v434 = vadd.f32 %v420, %v433
  %v435 = vpop.f32.mrf.mxu0
  %v436 = vadd.f32 %v422, %v435
  %437 = vdwg.mxu0
  %438 = vmatpush.bf16.msra.mxu0 %v311
  %439 = vmatpush.bf16.msra.mxu0 %v307
  %440 = vmatpush.bf16.msra.mxu0 %v303
  %441 = vmatpush.bf16.msra.mxu0 %v299
  %442 = vmatpush.bf16.msra.mxu0 %v295
  %443 = vmatpush.bf16.msra.mxu0 %v291
  %444 = vmatpush.bf16.msra.mxu0 %v287
  %445 = vmatpush.bf16.msra.mxu0 %v283
  %446 = vmatmul.bf16.gmra.mxu0 %v86
  %v447 = vpop.f32.mrf.mxu0
  %v448 = vadd.f32 0.0, %v447
  %v449 = vpop.f32.mrf.mxu0
  %v450 = vadd.f32 0.0, %v449
  %451 = vdwg.mxu0
  %452 = vmatpush.bf16.msra.mxu0 %v343
  %453 = vmatpush.bf16.msra.mxu0 %v339
  %454 = vmatpush.bf16.msra.mxu0 %v335
  %455 = vmatpush.bf16.msra.mxu0 %v331
  %456 = vmatpush.bf16.msra.mxu0 %v327
  %457 = vmatpush.bf16.msra.mxu0 %v323
  %458 = vmatpush.bf16.msra.mxu0 %v319
  %459 = vmatpush.bf16.msra.mxu0 %v315
  %460 = vmatmul.bf16.gmra.mxu0 %v87
  %v461 = vpop.f32.mrf.mxu0
  %v462 = vadd.f32 %v448, %v461
  %v463 = vpop.f32.mrf.mxu0
  %v464 = vadd.f32 %v450, %v463
  %465 = vdwg.mxu0
  %466 = vmatpush.bf16.msra.mxu0 %v312
  %467 = vmatpush.bf16.msra.mxu0 %v308
  %468 = vmatpush.bf16.msra.mxu0 %v304
  %469 = vmatpush.bf16.msra.mxu0 %v300
  %470 = vmatpush.bf16.msra.mxu0 %v296
  %471 = vmatpush.bf16.msra.mxu0 %v292
  %472 = vmatpush.bf16.msra.mxu0 %v288
  %473 = vmatpush.bf16.msra.mxu0 %v284
  %474 = vmatmul.bf16.gmra.mxu0 %v86
  %v475 = vpop.f32.mrf.mxu0
  %v476 = vadd.f32 0.0, %v475
  %v477 = vpop.f32.mrf.mxu0
  %v478 = vadd.f32 0.0, %v477
  %479 = vdwg.mxu0
  %480 = vmatpush.bf16.msra.mxu0 %v344
  %481 = vmatpush.bf16.msra.mxu0 %v340
  %482 = vmatpush.bf16.msra.mxu0 %v336
  %483 = vmatpush.bf16.msra.mxu0 %v332
  %484 = vmatpush.bf16.msra.mxu0 %v328
  %485 = vmatpush.bf16.msra.mxu0 %v324
  %486 = vmatpush.bf16.msra.mxu0 %v320
  %487 = vmatpush.bf16.msra.mxu0 %v316
  %488 = vmatmul.bf16.gmra.mxu0 %v87
  %v489 = vpop.f32.mrf.mxu0
  %v490 = vadd.f32 %v476, %v489
  %v491 = vpop.f32.mrf.mxu0
  %v492 = vadd.f32 %v478, %v491
  %493 = vdwg.mxu0
  %494 = vmatpush.bf16.msra.mxu0 %v313
  %495 = vmatpush.bf16.msra.mxu0 %v309
  %496 = vmatpush.bf16.msra.mxu0 %v305
  %497 = vmatpush.bf16.msra.mxu0 %v301
  %498 = vmatpush.bf16.msra.mxu0 %v297
  %499 = vmatpush.bf16.msra.mxu0 %v293
  %500 = vmatpush.bf16.msra.mxu0 %v289
  %501 = vmatpush.bf16.msra.mxu0 %v285
  %502 = vmatmul.bf16.gmra.mxu0 %v86
  %v503 = vpop.f32.mrf.mxu0
  %v504 = vadd.f32 0.0, %v503
  %v505 = vpop.f32.mrf.mxu0
  %v506 = vadd.f32 0.0, %v505
  %507 = vdwg.mxu0
  %508 = vmatpush.bf16.msra.mxu0 %v345
  %509 = vmatpush.bf16.msra.mxu0 %v341
  %510 = vmatpush.bf16.msra.mxu0 %v337
  %511 = vmatpush.bf16.msra.mxu0 %v333
  %512 = vmatpush.bf16.msra.mxu0 %v329
  %513 = vmatpush.bf16.msra.mxu0 %v325
  %514 = vmatpush.bf16.msra.mxu0 %v321
  %515 = vmatpush.bf16.msra.mxu0 %v317
  %516 = vmatmul.bf16.gmra.mxu0 %v87
  %v517 = vpop.f32.mrf.mxu0
  %v518 = vadd.f32 %v504, %v517
  %v519 = vpop.f32.mrf.mxu0
  %v520 = vadd.f32 %v506, %v519
  %521 = vdwg.mxu0
  %v522 = vmax.f32 %v434, %v462
  %v523 = vmax.f32 %v436, %v464
  %v524 = vmax.f32 %v522, %v490
  %v525 = vmax.f32 %v523, %v492
  %v526 = vmax.f32 %v524, %v518
  %v527 = vmax.f32 %v525, %v520
  %v528 = vld [vmem:[%s2] sm:$0xff]
  %v529 = vld [vmem:[%s2 + $0x8] sm:$0xff]
  %531 = vset.pattern.permute.xlu0 0
  %532 = vperm.xlu0 %531, %v528
  %v533 = vpop.permute.xlu0 %532
  %536 = vset.pattern.permute.xlu0 0
  %537 = vperm.xlu0 %536, %v529
  %v538 = vpop.permute.xlu0 %537
  %v540 = vadd.f32 %v526, %v533
  %v541 = vadd.f32 %v527, %v538
  %v542 = vmax.f32 %v540, 0.0
  %v543 = vmax.f32 %v541, 0.0
  %544 = vst [vmem:[%s3] sm:$0xff] %v542
  %545 = vst [vmem:[%s3 + $0x8] sm:$0xff] %v543
  // Predicated region
  $region14: #{net_cifar10_forward.4} parent=0 // pred_check
    _
  $region15: #{net_cifar10_forward.4} parent=0 // pred_check_branch
    %547 = sbr.rel (0) target = $region17
  $region16: #{net_cifar10_forward.4} parent=0 // pred_region
    _
  $region17: #{net_cifar10_forward.4} parent=0 // pred_fallthru
    _
  // Predicated region
  $region18: #{net_cifar10_forward.4} parent=0 // pred_check
    _
  $region19: #{net_cifar10_forward.4} parent=0 // pred_check_branch
    %549 = sbr.rel (0) target = $region21
  $region20: #{net_cifar10_forward.4} parent=0 // pred_region
    _
  $region21: #{net_cifar10_forward.4} parent=0 // pred_fallthru
    _

// kernel: net_cifar10_forward.5
$region0: #{net_cifar10_forward.5}
  #allocation0 [shape = 'u32[]', space=smem, size = 0x4, offset = 0x4, fixed_abs, tag = 'smem constant byte address 0x4 - core index']
  #allocation1 [shape = 'u32[72,128]{1,0:T(1,128)}', space=vmem, size = 0x9000, scoped, tag = 'internal scratch']
  %s0 = inlined_call_operand.vmem [shape: f32[400,128], index: 0, kind: input, shape index: {}]
  %s1 = inlined_call_operand.vmem [shape: f32[128,400], index: 1, kind: input, shape index: {}]
  %s2 = inlined_call_operand.vmem [shape: f32[128,1], index: 2, kind: input, shape index: {}]
  %s3 = inlined_call_operand.vmem [shape: f32[128,128], index: 3, kind: input, shape index: {}]
  %s4 = inlined_call_operand.vmem [shape: f32[128,1], index: 4, kind: input, shape index: {}]
  %s5 = inlined_call_operand.vmem [shape: f32[10,128], index: 5, kind: input, shape index: {}]
  %s6 = inlined_call_operand.vmem [shape: f32[10,1], index: 6, kind: input, shape index: {}]
  %s7 = inlined_call_operand.vmem [shape: f32[10,128], index: 7, kind: output, shape index: {}]
  %s8 = sld [smem:[#allocation0]]
  $region38: #{net_cifar10_forward.5} parent=0
    _
  %s10 = ssub.s32 1, %s8
  %s11 = scalar_select 0, %s10, %s8
  // Predicated region
  $region2: #{net_cifar10_forward.5} parent=0 // pred_check
    _
  $region3: #{net_cifar10_forward.5} parent=0 // pred_check_branch
    %13 = sbr.rel (0) target = $region5
  $region4: #{net_cifar10_forward.5} parent=0 // pred_region
    _
  $region5: #{net_cifar10_forward.5} parent=0 // pred_fallthru
    _
  // Predicated region
  $region6: #{net_cifar10_forward.5} parent=0 // pred_check
    _
  $region7: #{net_cifar10_forward.5} parent=0 // pred_check_branch
    %15 = sbr.rel (0) target = $region9
  $region8: #{net_cifar10_forward.5} parent=0 // pred_region
    _
  $region9: #{net_cifar10_forward.5} parent=0 // pred_fallthru
    _
  // Predicated region
  $region10: #{net_cifar10_forward.5} parent=0 // pred_check
    _
  $region11: #{net_cifar10_forward.5} parent=0 // pred_check_branch
    %17 = sbr.rel (0) target = $region13
  $region12: #{net_cifar10_forward.5} parent=0 // pred_region
    _
  $region13: #{net_cifar10_forward.5} parent=0 // pred_fallthru
    _
  // Predicated region
  $region14: #{net_cifar10_forward.5} parent=0 // pred_check
    _
  $region15: #{net_cifar10_forward.5} parent=0 // pred_check_branch
    %19 = sbr.rel (0) target = $region17
  $region16: #{net_cifar10_forward.5} parent=0 // pred_region
    _
  $region17: #{net_cifar10_forward.5} parent=0 // pred_fallthru
    _
  // Predicated region
  $region18: #{net_cifar10_forward.5} parent=0 // pred_check
    _
  $region19: #{net_cifar10_forward.5} parent=0 // pred_check_branch
    %21 = sbr.rel (0) target = $region21
  $region20: #{net_cifar10_forward.5} parent=0 // pred_region
    _
  $region21: #{net_cifar10_forward.5} parent=0 // pred_fallthru
    _
  // Predicated region
  $region22: #{net_cifar10_forward.5} parent=0 // pred_check
    _
  $region23: #{net_cifar10_forward.5} parent=0 // pred_check_branch
    %23 = sbr.rel (0) target = $region25
  $region24: #{net_cifar10_forward.5} parent=0 // pred_region
    _
  $region25: #{net_cifar10_forward.5} parent=0 // pred_fallthru
    _
  // Predicated region
  $region26: #{net_cifar10_forward.5} parent=0 // pred_check
    _
  $region27: #{net_cifar10_forward.5} parent=0 // pred_check_branch
    %25 = sbr.rel (0) target = $region29
  $region28: #{net_cifar10_forward.5} parent=0 // pred_region
    _
  $region29: #{net_cifar10_forward.5} parent=0 // pred_fallthru
    _
  %v26 = vld [vmem:[%s1] sm:$0xff]
  %v27 = vld [vmem:[%s1 + $0x8] sm:$0xff]
  %v28 = vld [vmem:[%s1 + $0x10] sm:$0xff]
  %v29 = vld [vmem:[%s1 + $0x18] sm:$0xff]
  %v30 = vld [vmem:[%s1 + $0x20] sm:$0xff]
  %v31 = vld [vmem:[%s1 + $0x28] sm:$0xff]
  %v32 = vld [vmem:[%s1 + $0x30] sm:$0xff]
  %v33 = vld [vmem:[%s1 + $0x38] sm:$0xff]
  %v34 = vld [vmem:[%s1 + $0x40] sm:$0xff]
  %v35 = vld [vmem:[%s1 + $0x48] sm:$0xff]
  %v36 = vld [vmem:[%s1 + $0x50] sm:$0xff]
  %v37 = vld [vmem:[%s1 + $0x58] sm:$0xff]
  %v38 = vld [vmem:[%s1 + $0x60] sm:$0xff]
  %v39 = vld [vmem:[%s1 + $0x68] sm:$0xff]
  %v40 = vld [vmem:[%s1 + $0x70] sm:$0xff]
  %v41 = vld [vmem:[%s1 + $0x78] sm:$0xff]
  %v42 = vld [vmem:[%s1 + $0x80] sm:$0xff]
  %v43 = vld [vmem:[%s1 + $0x88] sm:$0xff]
  %v44 = vld [vmem:[%s1 + $0x90] sm:$0xff]
  %v45 = vld [vmem:[%s1 + $0x98] sm:$0xff]
  %v46 = vld [vmem:[%s1 + $0xa0] sm:$0xff]
  %v47 = vld [vmem:[%s1 + $0xa8] sm:$0xff]
  %v48 = vld [vmem:[%s1 + $0xb0] sm:$0xff]
  %v49 = vld [vmem:[%s1 + $0xb8] sm:$0xff]
  %v50 = vld [vmem:[%s1 + $0xc0] sm:$0xff]
  %v51 = vld [vmem:[%s1 + $0xc8] sm:$0xff]
  %v52 = vld [vmem:[%s1 + $0xd0] sm:$0xff]
  %v53 = vld [vmem:[%s1 + $0xd8] sm:$0xff]
  %v54 = vld [vmem:[%s1 + $0xe0] sm:$0xff]
  %v55 = vld [vmem:[%s1 + $0xe8] sm:$0xff]
  %v56 = vld [vmem:[%s1 + $0xf0] sm:$0xff]
  %v57 = vld [vmem:[%s1 + $0xf8] sm:$0xff]
  %v58 = vld [vmem:[%s1 + $0x100] sm:$0xff]
  %v59 = vld [vmem:[%s1 + $0x108] sm:$0xff]
  %v60 = vld [vmem:[%s1 + $0x110] sm:$0xff]
  %v61 = vld [vmem:[%s1 + $0x118] sm:$0xff]
  %v62 = vld [vmem:[%s1 + $0x120] sm:$0xff]
  %v63 = vld [vmem:[%s1 + $0x128] sm:$0xff]
  %v64 = vld [vmem:[%s1 + $0x130] sm:$0xff]
  %v65 = vld [vmem:[%s1 + $0x138] sm:$0xff]
  %v66 = vld [vmem:[%s1 + $0x140] sm:$0xff]
  %v67 = vld [vmem:[%s1 + $0x148] sm:$0xff]
  %v68 = vld [vmem:[%s1 + $0x150] sm:$0xff]
  %v69 = vld [vmem:[%s1 + $0x158] sm:$0xff]
  %v70 = vld [vmem:[%s1 + $0x160] sm:$0xff]
  %v71 = vld [vmem:[%s1 + $0x168] sm:$0xff]
  %v72 = vld [vmem:[%s1 + $0x170] sm:$0xff]
  %v73 = vld [vmem:[%s1 + $0x178] sm:$0xff]
  %v74 = vld [vmem:[%s1 + $0x180] sm:$0xff]
  %v75 = vld [vmem:[%s1 + $0x188] sm:$0xff]
  %v76 = vld [vmem:[%s1 + $0x190] sm:$0xff]
  %v77 = vld [vmem:[%s1 + $0x198] sm:$0xff]
  %v78 = vld [vmem:[%s1 + $0x1a0] sm:$0xff]
  %v79 = vld [vmem:[%s1 + $0x1a8] sm:$0xff]
  %v80 = vld [vmem:[%s1 + $0x1b0] sm:$0xff]
  %v81 = vld [vmem:[%s1 + $0x1b8] sm:$0xff]
  %v82 = vld [vmem:[%s1 + $0x1c0] sm:$0xff]
  %v83 = vld [vmem:[%s1 + $0x1c8] sm:$0xff]
  %v84 = vld [vmem:[%s1 + $0x1d0] sm:$0xff]
  %v85 = vld [vmem:[%s1 + $0x1d8] sm:$0xff]
  %v86 = vld [vmem:[%s1 + $0x1e0] sm:$0xff]
  %v87 = vld [vmem:[%s1 + $0x1e8] sm:$0xff]
  %v88 = vld [vmem:[%s1 + $0x1f0] sm:$0xff]
  %v89 = vld [vmem:[%s1 + $0x1f8] sm:$0xff]
  %v90 = vld [vmem:[%s0] sm:$0xff]
  %v91 = vld [vmem:[%s0 + $0x8] sm:$0xff]
  %v92 = vld [vmem:[%s0 + $0x10] sm:$0xff]
  %v93 = vld [vmem:[%s0 + $0x18] sm:$0xff]
  %v94 = vld [vmem:[%s0 + $0x20] sm:$0xff]
  %v95 = vld [vmem:[%s0 + $0x28] sm:$0xff]
  %v96 = vld [vmem:[%s0 + $0x30] sm:$0xff]
  %v97 = vld [vmem:[%s0 + $0x38] sm:$0xff]
  %v98 = vld [vmem:[%s0 + $0x40] sm:$0xff]
  %v99 = vld [vmem:[%s0 + $0x48] sm:$0xff]
  %v100 = vld [vmem:[%s0 + $0x50] sm:$0xff]
  %v101 = vld [vmem:[%s0 + $0x58] sm:$0xff]
  %v102 = vld [vmem:[%s0 + $0x60] sm:$0xff]
  %v103 = vld [vmem:[%s0 + $0x68] sm:$0xff]
  %v104 = vld [vmem:[%s0 + $0x70] sm:$0xff]
  %v105 = vld [vmem:[%s0 + $0x78] sm:$0xff]
  %v106 = vld [vmem:[%s0 + $0x80] sm:$0xff]
  %v107 = vld [vmem:[%s0 + $0x88] sm:$0xff]
  %v108 = vld [vmem:[%s0 + $0x90] sm:$0xff]
  %v109 = vld [vmem:[%s0 + $0x98] sm:$0xff]
  %v110 = vld [vmem:[%s0 + $0xa0] sm:$0xff]
  %v111 = vld [vmem:[%s0 + $0xa8] sm:$0xff]
  %v112 = vld [vmem:[%s0 + $0xb0] sm:$0xff]
  %v113 = vld [vmem:[%s0 + $0xb8] sm:$0xff]
  %v114 = vld [vmem:[%s0 + $0xc0] sm:$0xff]
  %v115 = vld [vmem:[%s0 + $0xc8] sm:$0xff]
  %v116 = vld [vmem:[%s0 + $0xd0] sm:$0xff]
  %v117 = vld [vmem:[%s0 + $0xd8] sm:$0xff]
  %v118 = vld [vmem:[%s0 + $0xe0] sm:$0xff]
  %v119 = vld [vmem:[%s0 + $0xe8] sm:$0xff]
  %v120 = vld [vmem:[%s0 + $0xf0] sm:$0xff]
  %v121 = vld [vmem:[%s0 + $0xf8] sm:$0xff]
  %v122 = vld [vmem:[%s0 + $0x100] sm:$0xff]
  %v123 = vld [vmem:[%s0 + $0x108] sm:$0xff]
  %v124 = vld [vmem:[%s0 + $0x110] sm:$0xff]
  %v125 = vld [vmem:[%s0 + $0x118] sm:$0xff]
  %v126 = vld [vmem:[%s0 + $0x120] sm:$0xff]
  %v127 = vld [vmem:[%s0 + $0x128] sm:$0xff]
  %v128 = vld [vmem:[%s0 + $0x130] sm:$0xff]
  %v129 = vld [vmem:[%s0 + $0x138] sm:$0xff]
  %v130 = vld [vmem:[%s0 + $0x140] sm:$0xff]
  %v131 = vld [vmem:[%s0 + $0x148] sm:$0xff]
  %v132 = vld [vmem:[%s0 + $0x150] sm:$0xff]
  %v133 = vld [vmem:[%s0 + $0x158] sm:$0xff]
  %v134 = vld [vmem:[%s0 + $0x160] sm:$0xff]
  %v135 = vld [vmem:[%s0 + $0x168] sm:$0xff]
  %v136 = vld [vmem:[%s0 + $0x170] sm:$0xff]
  %v137 = vld [vmem:[%s0 + $0x178] sm:$0xff]
  %v138 = vld [vmem:[%s0 + $0x180] sm:$0xff]
  %v139 = vld [vmem:[%s0 + $0x188] sm:$0xff]
  %v140 = vld [vmem:[%s2] sm:$0xff]
  %v141 = vld [vmem:[%s2 + $0x8] sm:$0xff]
  %v142 = vld [vmem:[%s2 + $0x10] sm:$0xff]
  %v143 = vld [vmem:[%s2 + $0x18] sm:$0xff]
  %v144 = vld [vmem:[%s2 + $0x20] sm:$0xff]
  %v145 = vld [vmem:[%s2 + $0x28] sm:$0xff]
  %v146 = vld [vmem:[%s2 + $0x30] sm:$0xff]
  %v147 = vld [vmem:[%s2 + $0x38] sm:$0xff]
  %v148 = vld [vmem:[%s2 + $0x40] sm:$0xff]
  %v149 = vld [vmem:[%s2 + $0x48] sm:$0xff]
  %v150 = vld [vmem:[%s2 + $0x50] sm:$0xff]
  %v151 = vld [vmem:[%s2 + $0x58] sm:$0xff]
  %v152 = vld [vmem:[%s2 + $0x60] sm:$0xff]
  %v153 = vld [vmem:[%s2 + $0x68] sm:$0xff]
  %v154 = vld [vmem:[%s2 + $0x70] sm:$0xff]
  %v155 = vld [vmem:[%s2 + $0x78] sm:$0xff]
  %157 = vset.pattern.permute.xlu0 0
  %158 = vperm.xlu0 %157, %v140
  %v159 = vpop.permute.xlu0 %158
  %162 = vset.pattern.permute.xlu0 0
  %163 = vperm.xlu0 %162, %v141
  %v164 = vpop.permute.xlu0 %163
  %167 = vset.pattern.permute.xlu0 0
  %168 = vperm.xlu0 %167, %v142
  %v169 = vpop.permute.xlu0 %168
  %172 = vset.pattern.permute.xlu0 0
  %173 = vperm.xlu0 %172, %v143
  %v174 = vpop.permute.xlu0 %173
  %177 = vset.pattern.permute.xlu0 0
  %178 = vperm.xlu0 %177, %v144
  %v179 = vpop.permute.xlu0 %178
  %182 = vset.pattern.permute.xlu0 0
  %183 = vperm.xlu0 %182, %v145
  %v184 = vpop.permute.xlu0 %183
  %187 = vset.pattern.permute.xlu0 0
  %188 = vperm.xlu0 %187, %v146
  %v189 = vpop.permute.xlu0 %188
  %192 = vset.pattern.permute.xlu0 0
  %193 = vperm.xlu0 %192, %v147
  %v194 = vpop.permute.xlu0 %193
  %197 = vset.pattern.permute.xlu0 0
  %198 = vperm.xlu0 %197, %v148
  %v199 = vpop.permute.xlu0 %198
  %202 = vset.pattern.permute.xlu0 0
  %203 = vperm.xlu0 %202, %v149
  %v204 = vpop.permute.xlu0 %203
  %207 = vset.pattern.permute.xlu0 0
  %208 = vperm.xlu0 %207, %v150
  %v209 = vpop.permute.xlu0 %208
  %212 = vset.pattern.permute.xlu0 0
  %213 = vperm.xlu0 %212, %v151
  %v214 = vpop.permute.xlu0 %213
  %217 = vset.pattern.permute.xlu0 0
  %218 = vperm.xlu0 %217, %v152
  %v219 = vpop.permute.xlu0 %218
  %222 = vset.pattern.permute.xlu0 0
  %223 = vperm.xlu0 %222, %v153
  %v224 = vpop.permute.xlu0 %223
  %227 = vset.pattern.permute.xlu0 0
  %228 = vperm.xlu0 %227, %v154
  %v229 = vpop.permute.xlu0 %228
  %232 = vset.pattern.permute.xlu0 0
  %233 = vperm.xlu0 %232, %v155
  %v234 = vpop.permute.xlu0 %233
  %vm236 = vcmask 130048
  %v238 = vsel %vm236, %v29, 0
  %v241 = vsel %vm236, %v33, 0
  %v244 = vsel %vm236, %v37, 0
  %v247 = vsel %vm236, %v41, 0
  %v250 = vsel %vm236, %v45, 0
  %v253 = vsel %vm236, %v49, 0
  %v256 = vsel %vm236, %v53, 0
  %v259 = vsel %vm236, %v57, 0
  %v262 = vsel %vm236, %v61, 0
  %v265 = vsel %vm236, %v65, 0
  %v268 = vsel %vm236, %v69, 0
  %v271 = vsel %vm236, %v73, 0
  %v274 = vsel %vm236, %v77, 0
  %v277 = vsel %vm236, %v81, 0
  %v280 = vsel %vm236, %v85, 0
  %v283 = vsel %vm236, %v89, 0
  %285 = vmatpush.msra.mxu0 %v105
  %286 = vmatpush.msra.mxu0 %v104
  %287 = vmatpush.msra.mxu0 %v103
  %288 = vmatpush.msra.mxu0 %v102
  %289 = vmatpush.msra.mxu0 %v101
  %290 = vmatpush.msra.mxu0 %v100
  %291 = vmatpush.msra.mxu0 %v99
  %292 = vmatpush.msra.mxu0 %v98
  %293 = vmatpush.msra.mxu0 %v97
  %294 = vmatpush.msra.mxu0 %v96
  %295 = vmatpush.msra.mxu0 %v95
  %296 = vmatpush.msra.mxu0 %v94
  %297 = vmatpush.msra.mxu0 %v93
  %298 = vmatpush.msra.mxu0 %v92
  %299 = vmatpush.msra.mxu0 %v91
  %300 = vmatpush.msra.mxu0 %v90
  %301 = vmatmul.f32.gmra.mxu0 %v26
  %v302 = vpop.f32.mrf.mxu0
  %v303 = vadd.f32 %v159, %v302
  %304 = vmatmul.f32.gmra.mxu0 %v30
  %v305 = vpop.f32.mrf.mxu0
  %v306 = vadd.f32 %v164, %v305
  %307 = vmatmul.f32.gmra.mxu0 %v34
  %v308 = vpop.f32.mrf.mxu0
  %v309 = vadd.f32 %v169, %v308
  %310 = vmatmul.f32.gmra.mxu0 %v38
  %v311 = vpop.f32.mrf.mxu0
  %v312 = vadd.f32 %v174, %v311
  %313 = vmatmul.f32.gmra.mxu0 %v42
  %v314 = vpop.f32.mrf.mxu0
  %v315 = vadd.f32 %v179, %v314
  %316 = vmatmul.f32.gmra.mxu0 %v46
  %v317 = vpop.f32.mrf.mxu0
  %v318 = vadd.f32 %v184, %v317
  %319 = vmatmul.f32.gmra.mxu0 %v50
  %v320 = vpop.f32.mrf.mxu0
  %v321 = vadd.f32 %v189, %v320
  %322 = vmatmul.f32.gmra.mxu0 %v54
  %v323 = vpop.f32.mrf.mxu0
  %v324 = vadd.f32 %v194, %v323
  %325 = vmatmul.f32.gmra.mxu0 %v58
  %v326 = vpop.f32.mrf.mxu0
  %v327 = vadd.f32 %v199, %v326
  %328 = vmatmul.f32.gmra.mxu0 %v62
  %v329 = vpop.f32.mrf.mxu0
  %v330 = vadd.f32 %v204, %v329
  %331 = vmatmul.f32.gmra.mxu0 %v66
  %v332 = vpop.f32.mrf.mxu0
  %v333 = vadd.f32 %v209, %v332
  %334 = vmatmul.f32.gmra.mxu0 %v70
  %v335 = vpop.f32.mrf.mxu0
  %v336 = vadd.f32 %v214, %v335
  %337 = vmatmul.f32.gmra.mxu0 %v74
  %v338 = vpop.f32.mrf.mxu0
  %v339 = vadd.f32 %v219, %v338
  %340 = vmatmul.f32.gmra.mxu0 %v78
  %v341 = vpop.f32.mrf.mxu0
  %v342 = vadd.f32 %v224, %v341
  %343 = vmatmul.f32.gmra.mxu0 %v82
  %v344 = vpop.f32.mrf.mxu0
  %v345 = vadd.f32 %v229, %v344
  %346 = vmatmul.f32.gmra.mxu0 %v86
  %v347 = vpop.f32.mrf.mxu0
  %v348 = vadd.f32 %v234, %v347
  %349 = vdwg.mxu0
  %350 = vmatpush.msra.mxu0 %v121
  %351 = vmatpush.msra.mxu0 %v120
  %352 = vmatpush.msra.mxu0 %v119
  %353 = vmatpush.msra.mxu0 %v118
  %354 = vmatpush.msra.mxu0 %v117
  %355 = vmatpush.msra.mxu0 %v116
  %356 = vmatpush.msra.mxu0 %v115
  %357 = vmatpush.msra.mxu0 %v114
  %358 = vmatpush.msra.mxu0 %v113
  %359 = vmatpush.msra.mxu0 %v112
  %360 = vmatpush.msra.mxu0 %v111
  %361 = vmatpush.msra.mxu0 %v110
  %362 = vmatpush.msra.mxu0 %v109
  %363 = vmatpush.msra.mxu0 %v108
  %364 = vmatpush.msra.mxu0 %v107
  %365 = vmatpush.msra.mxu0 %v106
  %366 = vmatmul.f32.gmra.mxu0 %v27
  %v367 = vpop.f32.mrf.mxu0
  %v368 = vadd.f32 %v303, %v367
  %369 = vmatmul.f32.gmra.mxu0 %v31
  %v370 = vpop.f32.mrf.mxu0
  %v371 = vadd.f32 %v306, %v370
  %372 = vmatmul.f32.gmra.mxu0 %v35
  %v373 = vpop.f32.mrf.mxu0
  %v374 = vadd.f32 %v309, %v373
  %375 = vmatmul.f32.gmra.mxu0 %v39
  %v376 = vpop.f32.mrf.mxu0
  %v377 = vadd.f32 %v312, %v376
  %378 = vmatmul.f32.gmra.mxu0 %v43
  %v379 = vpop.f32.mrf.mxu0
  %v380 = vadd.f32 %v315, %v379
  %381 = vmatmul.f32.gmra.mxu0 %v47
  %v382 = vpop.f32.mrf.mxu0
  %v383 = vadd.f32 %v318, %v382
  %384 = vmatmul.f32.gmra.mxu0 %v51
  %v385 = vpop.f32.mrf.mxu0
  %v386 = vadd.f32 %v321, %v385
  %387 = vmatmul.f32.gmra.mxu0 %v55
  %v388 = vpop.f32.mrf.mxu0
  %v389 = vadd.f32 %v324, %v388
  %390 = vmatmul.f32.gmra.mxu0 %v59
  %v391 = vpop.f32.mrf.mxu0
  %v392 = vadd.f32 %v327, %v391
  %393 = vmatmul.f32.gmra.mxu0 %v63
  %v394 = vpop.f32.mrf.mxu0
  %v395 = vadd.f32 %v330, %v394
  %396 = vmatmul.f32.gmra.mxu0 %v67
  %v397 = vpop.f32.mrf.mxu0
  %v398 = vadd.f32 %v333, %v397
  %399 = vmatmul.f32.gmra.mxu0 %v71
  %v400 = vpop.f32.mrf.mxu0
  %v401 = vadd.f32 %v336, %v400
  %402 = vmatmul.f32.gmra.mxu0 %v75
  %v403 = vpop.f32.mrf.mxu0
  %v404 = vadd.f32 %v339, %v403
  %405 = vmatmul.f32.gmra.mxu0 %v79
  %v406 = vpop.f32.mrf.mxu0
  %v407 = vadd.f32 %v342, %v406
  %408 = vmatmul.f32.gmra.mxu0 %v83
  %v409 = vpop.f32.mrf.mxu0
  %v410 = vadd.f32 %v345, %v409
  %411 = vmatmul.f32.gmra.mxu0 %v87
  %v412 = vpop.f32.mrf.mxu0
  %v413 = vadd.f32 %v348, %v412
  %414 = vdwg.mxu0
  %415 = vmatpush.msra.mxu0 %v137
  %416 = vmatpush.msra.mxu0 %v136
  %417 = vmatpush.msra.mxu0 %v135
  %418 = vmatpush.msra.mxu0 %v134
  %419 = vmatpush.msra.mxu0 %v133
  %420 = vmatpush.msra.mxu0 %v132
  %421 = vmatpush.msra.mxu0 %v131
  %422 = vmatpush.msra.mxu0 %v130
  %423 = vmatpush.msra.mxu0 %v129
  %424 = vmatpush.msra.mxu0 %v128
  %425 = vmatpush.msra.mxu0 %v127
  %426 = vmatpush.msra.mxu0 %v126
  %427 = vmatpush.msra.mxu0 %v125
  %428 = vmatpush.msra.mxu0 %v124
  %429 = vmatpush.msra.mxu0 %v123
  %430 = vmatpush.msra.mxu0 %v122
  %431 = vmatmul.f32.gmra.mxu0 %v28
  %v432 = vpop.f32.mrf.mxu0
  %v433 = vadd.f32 %v368, %v432
  %434 = vmatmul.f32.gmra.mxu0 %v32
  %v435 = vpop.f32.mrf.mxu0
  %v436 = vadd.f32 %v371, %v435
  %437 = vmatmul.f32.gmra.mxu0 %v36
  %v438 = vpop.f32.mrf.mxu0
  %v439 = vadd.f32 %v374, %v438
  %440 = vmatmul.f32.gmra.mxu0 %v40
  %v441 = vpop.f32.mrf.mxu0
  %v442 = vadd.f32 %v377, %v441
  %443 = vmatmul.f32.gmra.mxu0 %v44
  %v444 = vpop.f32.mrf.mxu0
  %v445 = vadd.f32 %v380, %v444
  %446 = vmatmul.f32.gmra.mxu0 %v48
  %v447 = vpop.f32.mrf.mxu0
  %v448 = vadd.f32 %v383, %v447
  %449 = vmatmul.f32.gmra.mxu0 %v52
  %v450 = vpop.f32.mrf.mxu0
  %v451 = vadd.f32 %v386, %v450
  %452 = vmatmul.f32.gmra.mxu0 %v56
  %v453 = vpop.f32.mrf.mxu0
  %v454 = vadd.f32 %v389, %v453
  %455 = vmatmul.f32.gmra.mxu0 %v60
  %v456 = vpop.f32.mrf.mxu0
  %v457 = vadd.f32 %v392, %v456
  %458 = vmatmul.f32.gmra.mxu0 %v64
  %v459 = vpop.f32.mrf.mxu0
  %v460 = vadd.f32 %v395, %v459
  %461 = vmatmul.f32.gmra.mxu0 %v68
  %v462 = vpop.f32.mrf.mxu0
  %v463 = vadd.f32 %v398, %v462
  %464 = vmatmul.f32.gmra.mxu0 %v72
  %v465 = vpop.f32.mrf.mxu0
  %v466 = vadd.f32 %v401, %v465
  %467 = vmatmul.f32.gmra.mxu0 %v76
  %v468 = vpop.f32.mrf.mxu0
  %v469 = vadd.f32 %v404, %v468
  %470 = vmatmul.f32.gmra.mxu0 %v80
  %v471 = vpop.f32.mrf.mxu0
  %v472 = vadd.f32 %v407, %v471
  %473 = vmatmul.f32.gmra.mxu0 %v84
  %v474 = vpop.f32.mrf.mxu0
  %v475 = vadd.f32 %v410, %v474
  %476 = vmatmul.f32.gmra.mxu0 %v88
  %v477 = vpop.f32.mrf.mxu0
  %v478 = vadd.f32 %v413, %v477
  %479 = vdwg.mxu0
  %480 = vmatpush.msra.mxu0 0.0
  %481 = vmatpush.msra.mxu0 0.0
  %482 = vmatpush.msra.mxu0 0.0
  %483 = vmatpush.msra.mxu0 0.0
  %484 = vmatpush.msra.mxu0 0.0
  %485 = vmatpush.msra.mxu0 0.0
  %486 = vmatpush.msra.mxu0 0.0
  %487 = vmatpush.msra.mxu0 0.0
  %488 = vmatpush.msra.mxu0 0.0
  %489 = vmatpush.msra.mxu0 0.0
  %490 = vmatpush.msra.mxu0 0.0
  %491 = vmatpush.msra.mxu0 0.0
  %492 = vmatpush.msra.mxu0 0.0
  %493 = vmatpush.msra.mxu0 0.0
  %494 = vmatpush.msra.mxu0 %v139
  %495 = vmatpush.msra.mxu0 %v138
  %496 = vmatmul.f32.gmra.mxu0 %v238
  %v497 = vpop.f32.mrf.mxu0
  %v498 = vadd.f32 %v433, %v497
  %499 = vmatmul.f32.gmra.mxu0 %v241
  %v500 = vpop.f32.mrf.mxu0
  %v501 = vadd.f32 %v436, %v500
  %502 = vmatmul.f32.gmra.mxu0 %v244
  %v503 = vpop.f32.mrf.mxu0
  %v504 = vadd.f32 %v439, %v503
  %505 = vmatmul.f32.gmra.mxu0 %v247
  %v506 = vpop.f32.mrf.mxu0
  %v507 = vadd.f32 %v442, %v506
  %508 = vmatmul.f32.gmra.mxu0 %v250
  %v509 = vpop.f32.mrf.mxu0
  %v510 = vadd.f32 %v445, %v509
  %511 = vmatmul.f32.gmra.mxu0 %v253
  %v512 = vpop.f32.mrf.mxu0
  %v513 = vadd.f32 %v448, %v512
  %514 = vmatmul.f32.gmra.mxu0 %v256
  %v515 = vpop.f32.mrf.mxu0
  %v516 = vadd.f32 %v451, %v515
  %517 = vmatmul.f32.gmra.mxu0 %v259
  %v518 = vpop.f32.mrf.mxu0
  %v519 = vadd.f32 %v454, %v518
  %520 = vmatmul.f32.gmra.mxu0 %v262
  %v521 = vpop.f32.mrf.mxu0
  %v522 = vadd.f32 %v457, %v521
  %523 = vmatmul.f32.gmra.mxu0 %v265
  %v524 = vpop.f32.mrf.mxu0
  %v525 = vadd.f32 %v460, %v524
  %526 = vmatmul.f32.gmra.mxu0 %v268
  %v527 = vpop.f32.mrf.mxu0
  %v528 = vadd.f32 %v463, %v527
  %529 = vmatmul.f32.gmra.mxu0 %v271
  %v530 = vpop.f32.mrf.mxu0
  %v531 = vadd.f32 %v466, %v530
  %532 = vmatmul.f32.gmra.mxu0 %v274
  %v533 = vpop.f32.mrf.mxu0
  %v534 = vadd.f32 %v469, %v533
  %535 = vmatmul.f32.gmra.mxu0 %v277
  %v536 = vpop.f32.mrf.mxu0
  %v537 = vadd.f32 %v472, %v536
  %538 = vmatmul.f32.gmra.mxu0 %v280
  %v539 = vpop.f32.mrf.mxu0
  %v540 = vadd.f32 %v475, %v539
  %541 = vmatmul.f32.gmra.mxu0 %v283
  %v542 = vpop.f32.mrf.mxu0
  %v543 = vadd.f32 %v478, %v542
  %544 = vdwg.mxu0
  %v545 = vmax.f32 %v498, 0.0
  %v546 = vmax.f32 %v501, 0.0
  %v547 = vmax.f32 %v504, 0.0
  %v548 = vmax.f32 %v507, 0.0
  %v549 = vmax.f32 %v510, 0.0
  %v550 = vmax.f32 %v513, 0.0
  %v551 = vmax.f32 %v516, 0.0
  %v552 = vmax.f32 %v519, 0.0
  %v553 = vmax.f32 %v522, 0.0
  %v554 = vmax.f32 %v525, 0.0
  %v555 = vmax.f32 %v528, 0.0
  %v556 = vmax.f32 %v531, 0.0
  %v557 = vmax.f32 %v534, 0.0
  %v558 = vmax.f32 %v537, 0.0
  %v559 = vmax.f32 %v540, 0.0
  %v560 = vmax.f32 %v543, 0.0
  %v561 = vld [vmem:[%s3] sm:$0xff]
  %v562 = vld [vmem:[%s3 + $0x8] sm:$0xff]
  %v563 = vld [vmem:[%s3 + $0x10] sm:$0xff]
  %v564 = vld [vmem:[%s3 + $0x18] sm:$0xff]
  %v565 = vld [vmem:[%s3 + $0x20] sm:$0xff]
  %v566 = vld [vmem:[%s3 + $0x28] sm:$0xff]
  %v567 = vld [vmem:[%s3 + $0x30] sm:$0xff]
  %v568 = vld [vmem:[%s3 + $0x38] sm:$0xff]
  %v569 = vld [vmem:[%s3 + $0x40] sm:$0xff]
  %v570 = vld [vmem:[%s3 + $0x48] sm:$0xff]
  %v571 = vld [vmem:[%s3 + $0x50] sm:$0xff]
  %v572 = vld [vmem:[%s3 + $0x58] sm:$0xff]
  %v573 = vld [vmem:[%s3 + $0x60] sm:$0xff]
  %v574 = vld [vmem:[%s3 + $0x68] sm:$0xff]
  %v575 = vld [vmem:[%s3 + $0x70] sm:$0xff]
  %v576 = vld [vmem:[%s3 + $0x78] sm:$0xff]
  %v577 = vld [vmem:[%s4] sm:$0xff]
  %v578 = vld [vmem:[%s4 + $0x8] sm:$0xff]
  %v579 = vld [vmem:[%s4 + $0x10] sm:$0xff]
  %v580 = vld [vmem:[%s4 + $0x18] sm:$0xff]
  %v581 = vld [vmem:[%s4 + $0x20] sm:$0xff]
  %v582 = vld [vmem:[%s4 + $0x28] sm:$0xff]
  %v583 = vld [vmem:[%s4 + $0x30] sm:$0xff]
  %v584 = vld [vmem:[%s4 + $0x38] sm:$0xff]
  %v585 = vld [vmem:[%s4 + $0x40] sm:$0xff]
  %v586 = vld [vmem:[%s4 + $0x48] sm:$0xff]
  %v587 = vld [vmem:[%s4 + $0x50] sm:$0xff]
  %v588 = vld [vmem:[%s4 + $0x58] sm:$0xff]
  %v589 = vld [vmem:[%s4 + $0x60] sm:$0xff]
  %v590 = vld [vmem:[%s4 + $0x68] sm:$0xff]
  %v591 = vld [vmem:[%s4 + $0x70] sm:$0xff]
  %v592 = vld [vmem:[%s4 + $0x78] sm:$0xff]
  %594 = vset.pattern.permute.xlu0 0
  %595 = vperm.xlu0 %594, %v577
  %v596 = vpop.permute.xlu0 %595
  %599 = vset.pattern.permute.xlu0 0
  %600 = vperm.xlu0 %599, %v578
  %v601 = vpop.permute.xlu0 %600
  %604 = vset.pattern.permute.xlu0 0
  %605 = vperm.xlu0 %604, %v579
  %v606 = vpop.permute.xlu0 %605
  %609 = vset.pattern.permute.xlu0 0
  %610 = vperm.xlu0 %609, %v580
  %v611 = vpop.permute.xlu0 %610
  %614 = vset.pattern.permute.xlu0 0
  %615 = vperm.xlu0 %614, %v581
  %v616 = vpop.permute.xlu0 %615
  %619 = vset.pattern.permute.xlu0 0
  %620 = vperm.xlu0 %619, %v582
  %v621 = vpop.permute.xlu0 %620
  %624 = vset.pattern.permute.xlu0 0
  %625 = vperm.xlu0 %624, %v583
  %v626 = vpop.permute.xlu0 %625
  %629 = vset.pattern.permute.xlu0 0
  %630 = vperm.xlu0 %629, %v584
  %v631 = vpop.permute.xlu0 %630
  %634 = vset.pattern.permute.xlu0 0
  %635 = vperm.xlu0 %634, %v585
  %v636 = vpop.permute.xlu0 %635
  %639 = vset.pattern.permute.xlu0 0
  %640 = vperm.xlu0 %639, %v586
  %v641 = vpop.permute.xlu0 %640
  %644 = vset.pattern.permute.xlu0 0
  %645 = vperm.xlu0 %644, %v587
  %v646 = vpop.permute.xlu0 %645
  %649 = vset.pattern.permute.xlu0 0
  %650 = vperm.xlu0 %649, %v588
  %v651 = vpop.permute.xlu0 %650
  %654 = vset.pattern.permute.xlu0 0
  %655 = vperm.xlu0 %654, %v589
  %v656 = vpop.permute.xlu0 %655
  %659 = vset.pattern.permute.xlu0 0
  %660 = vperm.xlu0 %659, %v590
  %v661 = vpop.permute.xlu0 %660
  %664 = vset.pattern.permute.xlu0 0
  %665 = vperm.xlu0 %664, %v591
  %v666 = vpop.permute.xlu0 %665
  %669 = vset.pattern.permute.xlu0 0
  %670 = vperm.xlu0 %669, %v592
  %v671 = vpop.permute.xlu0 %670
  %673 = vmatpush.msra.mxu0 %v560
  %674 = vmatpush.msra.mxu0 %v559
  %675 = vmatpush.msra.mxu0 %v558
  %676 = vmatpush.msra.mxu0 %v557
  %677 = vmatpush.msra.mxu0 %v556
  %678 = vmatpush.msra.mxu0 %v555
  %679 = vmatpush.msra.mxu0 %v554
  %680 = vmatpush.msra.mxu0 %v553
  %681 = vmatpush.msra.mxu0 %v552
  %682 = vmatpush.msra.mxu0 %v551
  %683 = vmatpush.msra.mxu0 %v550
  %684 = vmatpush.msra.mxu0 %v549
  %685 = vmatpush.msra.mxu0 %v548
  %686 = vmatpush.msra.mxu0 %v547
  %687 = vmatpush.msra.mxu0 %v546
  %688 = vmatpush.msra.mxu0 %v545
  %689 = vmatmul.f32.gmra.mxu0 %v561
  %v690 = vpop.f32.mrf.mxu0
  %v691 = vadd.f32 %v596, %v690
  %692 = vmatmul.f32.gmra.mxu0 %v562
  %v693 = vpop.f32.mrf.mxu0
  %v694 = vadd.f32 %v601, %v693
  %695 = vmatmul.f32.gmra.mxu0 %v563
  %v696 = vpop.f32.mrf.mxu0
  %v697 = vadd.f32 %v606, %v696
  %698 = vmatmul.f32.gmra.mxu0 %v564
  %v699 = vpop.f32.mrf.mxu0
  %v700 = vadd.f32 %v611, %v699
  %701 = vmatmul.f32.gmra.mxu0 %v565
  %v702 = vpop.f32.mrf.mxu0
  %v703 = vadd.f32 %v616, %v702
  %704 = vmatmul.f32.gmra.mxu0 %v566
  %v705 = vpop.f32.mrf.mxu0
  %v706 = vadd.f32 %v621, %v705
  %707 = vmatmul.f32.gmra.mxu0 %v567
  %v708 = vpop.f32.mrf.mxu0
  %v709 = vadd.f32 %v626, %v708
  %710 = vmatmul.f32.gmra.mxu0 %v568
  %v711 = vpop.f32.mrf.mxu0
  %v712 = vadd.f32 %v631, %v711
  %713 = vmatmul.f32.gmra.mxu0 %v569
  %v714 = vpop.f32.mrf.mxu0
  %v715 = vadd.f32 %v636, %v714
  %716 = vmatmul.f32.gmra.mxu0 %v570
  %v717 = vpop.f32.mrf.mxu0
  %v718 = vadd.f32 %v641, %v717
  %719 = vmatmul.f32.gmra.mxu0 %v571
  %v720 = vpop.f32.mrf.mxu0
  %v721 = vadd.f32 %v646, %v720
  %722 = vmatmul.f32.gmra.mxu0 %v572
  %v723 = vpop.f32.mrf.mxu0
  %v724 = vadd.f32 %v651, %v723
  %725 = vmatmul.f32.gmra.mxu0 %v573
  %v726 = vpop.f32.mrf.mxu0
  %v727 = vadd.f32 %v656, %v726
  %728 = vmatmul.f32.gmra.mxu0 %v574
  %v729 = vpop.f32.mrf.mxu0
  %v730 = vadd.f32 %v661, %v729
  %731 = vmatmul.f32.gmra.mxu0 %v575
  %v732 = vpop.f32.mrf.mxu0
  %v733 = vadd.f32 %v666, %v732
  %734 = vmatmul.f32.gmra.mxu0 %v576
  %v735 = vpop.f32.mrf.mxu0
  %v736 = vadd.f32 %v671, %v735
  %737 = vdwg.mxu0
  %v738 = vmax.f32 %v691, 0.0
  %v739 = vmax.f32 %v694, 0.0
  %v740 = vmax.f32 %v697, 0.0
  %v741 = vmax.f32 %v700, 0.0
  %v742 = vmax.f32 %v703, 0.0
  %v743 = vmax.f32 %v706, 0.0
  %v744 = vmax.f32 %v709, 0.0
  %v745 = vmax.f32 %v712, 0.0
  %v746 = vmax.f32 %v715, 0.0
  %v747 = vmax.f32 %v718, 0.0
  %v748 = vmax.f32 %v721, 0.0
  %v749 = vmax.f32 %v724, 0.0
  %v750 = vmax.f32 %v727, 0.0
  %v751 = vmax.f32 %v730, 0.0
  %v752 = vmax.f32 %v733, 0.0
  %v753 = vmax.f32 %v736, 0.0
  %v754 = vld [vmem:[%s5] sm:$0xff]
  %v755 = vld [vmem:[%s5 + $0x8] sm:$0x3]
  %v756 = vld [vmem:[%s6] sm:$0xff]
  %v757 = vld [vmem:[%s6 + $0x8] sm:$0x3]
  %759 = vset.pattern.permute.xlu0 0
  %760 = vperm.xlu0 %759, %v756
  %v761 = vpop.permute.xlu0 %760
  %764 = vset.pattern.permute.xlu0 0
  %765 = vperm.xlu0 %764, %v757
  %v766 = vpop.permute.xlu0 %765
  %768 = vmatpush.msra.mxu0 %v753
  %769 = vmatpush.msra.mxu0 %v752
  %770 = vmatpush.msra.mxu0 %v751
  %771 = vmatpush.msra.mxu0 %v750
  %772 = vmatpush.msra.mxu0 %v749
  %773 = vmatpush.msra.mxu0 %v748
  %774 = vmatpush.msra.mxu0 %v747
  %775 = vmatpush.msra.mxu0 %v746
  %776 = vmatpush.msra.mxu0 %v745
  %777 = vmatpush.msra.mxu0 %v744
  %778 = vmatpush.msra.mxu0 %v743
  %779 = vmatpush.msra.mxu0 %v742
  %780 = vmatpush.msra.mxu0 %v741
  %781 = vmatpush.msra.mxu0 %v740
  %782 = vmatpush.msra.mxu0 %v739
  %783 = vmatpush.msra.mxu0 %v738
  %784 = vmatmul.f32.gmra.mxu0 %v754
  %v785 = vpop.f32.mrf.mxu0
  %v786 = vadd.f32 %v761, %v785
  %787 = vmatmul.f32.gmra.mxu0 %v755
  %v788 = vpop.f32.mrf.mxu0
  %v789 = vadd.f32 %v766, %v788
  %790 = vdwg.mxu0
  %791 = vst [vmem:[%s7] sm:$0xff] %v786
  %792 = vst [vmem:[%s7 + $0x8] sm:$0x3] %v789
  // Predicated region
  $region30: #{net_cifar10_forward.5} parent=0 // pred_check
    _
  $region31: #{net_cifar10_forward.5} parent=0 // pred_check_branch
    %794 = sbr.rel (0) target = $region33
  $region32: #{net_cifar10_forward.5} parent=0 // pred_region
    _
  $region33: #{net_cifar10_forward.5} parent=0 // pred_fallthru
    _
  // Predicated region
  $region34: #{net_cifar10_forward.5} parent=0 // pred_check
    _
  $region35: #{net_cifar10_forward.5} parent=0 // pred_check_branch
    %796 = sbr.rel (0) target = $region37
  $region36: #{net_cifar10_forward.5} parent=0 // pred_region
    _
  $region37: #{net_cifar10_forward.5} parent=0 // pred_fallthru
    _

</llo_original>
